<compile_context>
chip_gen: v7x
topology: tpu7x:2x2x1
jax: 0.10.0
libtpu: 0.0.40
codegen_flags: <defaults>
</compile_context>

<pallas_src>
import functools

import jax
import jax.numpy as jnp
from jax.experimental import pallas as pl
from jax.experimental.pallas import tpu as pltpu

BN_EPS = 1e-5


def _round_up(x, m):
    return (x + m - 1) // m * m


# ---------------------------------------------------------------------------
# Pass 1: accumulate per-channel sum and sum-of-squares of relu(conv + bias).
# Grid = (nsplit, steps): leading axis is "parallel" (v7x megacore shards the
# reduction), inner axis is "arbitrary" (resident accumulation across row tiles).
# ---------------------------------------------------------------------------
def _stats_kernel(p_ref, w_ref, b_ref, sum_ref, sq_ref, *, tm, m_valid, m_pad):
    c = pl.program_id(0)
    i = pl.program_id(1)

    @pl.when(i == 0)
    def _():
        sum_ref[...] = jnp.zeros_like(sum_ref)
        sq_ref[...] = jnp.zeros_like(sq_ref)

    y = jnp.dot(p_ref[...], w_ref[...], preferred_element_type=jnp.float32)
    y = jnp.maximum(y + b_ref[...], 0.0)

    # Per-channel sum / sumsq via a ones-row matmul: rides the otherwise idle MXU
    # slot instead of a sublane (XLU) reduction over thousands of rows.
    # The (rows -> multiple of tile) padding mask is folded into this (1, tm) row
    # (padded patch rows give y = relu(bias) != 0, so they must not contribute),
    # and is only generated at trace time when padding rows exist at all.
    if m_pad != m_valid:
        row0 = (c * pl.num_programs(1) + i) * tm
        rid = jax.lax.broadcasted_iota(jnp.int32, (1, tm), 1) + row0
        ones = (rid < m_valid).astype(jnp.float32)
    else:
        ones = jnp.ones((1, tm), jnp.float32)

    s1 = jnp.dot(ones, y, preferred_element_type=jnp.float32)        # (1, Cp)
    s2 = jnp.dot(ones, y * y, preferred_element_type=jnp.float32)    # (1, Cp)
    sum_ref[...] += s1.reshape(sum_ref.shape)
    sq_ref[...] += s2.reshape(sq_ref.shape)


# ---------------------------------------------------------------------------
# Pass 2: recompute relu(conv + bias) per tile and apply the folded BatchNorm.
# ---------------------------------------------------------------------------
def _apply_kernel(p_ref, w_ref, b_ref, scale_ref, shift_ref, o_ref):
    y = jnp.dot(p_ref[...], w_ref[...], preferred_element_type=jnp.float32)
    y = jnp.maximum(y + b_ref[...], 0.0)
    o_ref[...] = (y * scale_ref[...] + shift_ref[...]).astype(o_ref.dtype)


def spectral_normalize(w_oihw, u, eps=1e-12):
    # One power iteration on W reshaped to (Cout, Cin*kh*kw) -- PyTorch spectral_norm default.
    cout = w_oihw.shape[0]
    w_mat = w_oihw.reshape(cout, -1)
    v = w_mat.T @ u
    v = v / (jnp.linalg.norm(v) + eps)
    u_new = w_mat @ v
    u_new = u_new / (jnp.linalg.norm(u_new) + eps)
    sigma = u_new @ (w_mat @ v)
    return w_oihw / sigma


def im2col_nhwc(x_nhwc):
    n, h, w, c = x_nhwc.shape
    xp = jnp.pad(x_nhwc, ((0, 0), (1, 1), (1, 1), (0, 0)))
    cols = []
    for dy in range(3):
        for dx in range(3):
            cols.append(xp[:, dy:dy + h, dx:dx + w, :])
    patches = jnp.concatenate(cols, axis=-1)        # (N, H, W, 9*Cin)
    return patches.reshape(n * h * w, 9 * c)


def sparse_conv_block(x_nchw, w_oihw, bias, gamma, beta, u,
                      *, tm=1024, compute_dtype=jnp.float32, out_dtype=jnp.float32):
    n, cin, h, w = x_nchw.shape
    cout = w_oihw.shape[0]
    m = n * h * w
    k = 9 * cin
    cp = _round_up(cout, 128)                        # lane-dense output channels
    tm = _round_up(min(tm, _round_up(m, 8)), 8)      # row-tile size (multiple of 8 sublanes)
    n_tiles = -(-m // tm)
    nsplit = 2 if n_tiles >= 2 else 1                # shard pass-1 across v7x's 2 TensorCores
    m_pad = _round_up(m, tm * nsplit)
    steps = m_pad // (tm * nsplit)

    # VMEM budget: double-buffered patch + output tiles, resident weights (with headroom).
    cbytes = jnp.dtype(compute_dtype).itemsize
    est = 2 * tm * k * cbytes + 2 * k * cp * cbytes + 2 * tm * cp * 4 + 16 * cp * 4
    vmem_limit = int(min(48 * 2**20, max(16 * 2**20, 3 * est)))

    # ---- parameter / layout glue (plain JAX; fused by jit around this fn) ----
    w_sn = spectral_normalize(w_oihw, u)
    # (Cout, Cin, kh, kw) -> (kh, kw, Cin, Cout) -> (9*Cin, Cout), matching im2col tap order.
    w_mat = jnp.transpose(w_sn, (2, 3, 1, 0)).reshape(k, cout)
    w_mat = jnp.pad(w_mat, ((0, 0), (0, cp - cout))).astype(compute_dtype)
    bias_p = jnp.pad(bias, (0, cp - cout)).reshape(1, cp).astype(jnp.float32)

    # NCHW in/out is part of the module's contract; the transposes are small next to patches.
    x_nhwc = jnp.transpose(x_nchw, (0, 2, 3, 1))
    patches = im2col_nhwc(x_nhwc)                               # (m, 9*Cin)
    patches = jnp.pad(patches, ((0, m_pad - m), (0, 0))).astype(compute_dtype)

    # ---- pass 1: global per-channel sum / sumsq, accumulated across row tiles ----
    sums, sqs = pl.pallas_call(
        functools.partial(_stats_kernel, tm=tm, m_valid=m, m_pad=m_pad),
        out_shape=(jax.ShapeDtypeStruct((nsplit, 1, cp), jnp.float32),
                   jax.ShapeDtypeStruct((nsplit, 1, cp), jnp.float32)),
        grid=(nsplit, steps),
        in_specs=[
            pl.BlockSpec((tm, k), lambda c, i: (c * steps + i, 0)),
            pl.BlockSpec((k, cp), lambda c, i: (0, 0)),
            pl.BlockSpec((1, cp), lambda c, i: (0, 0)),
        ],
        out_specs=(
            pl.BlockSpec((1, 1, cp), lambda c, i: (c, 0, 0)),
            pl.BlockSpec((1, 1, cp), lambda c, i: (c, 0, 0)),
        ),
        compiler_params=pltpu.CompilerParams(
            dimension_semantics=("parallel", "arbitrary"),
            vmem_limit_bytes=vmem_limit),
    )(patches, w_mat, bias_p)

    tot = jnp.sum(sums, axis=0)[0]                   # (cp,) merge per-core partials
    totsq = jnp.sum(sqs, axis=0)[0]
    mean = tot[:cout] / m
    # Biased variance, like PyTorch's normalization path.  E[y^2]-E[y]^2 in f32 is fine at
    # these sample counts; for very large M / extreme means switch to a Welford-style merge.
    var = jnp.maximum(totsq[:cout] / m - mean * mean, 0.0)
    rstd = jax.lax.rsqrt(var + BN_EPS)
    scale = gamma * rstd
    shift = beta - mean * scale
    scale_p = jnp.pad(scale, (0, cp - cout)).reshape(1, cp).astype(jnp.float32)
    shift_p = jnp.pad(shift, (0, cp - cout)).reshape(1, cp).astype(jnp.float32)

    # ---- pass 2: conv + bias + relu + folded BN, lane-dense tiled output ----
    out_flat = pl.pallas_call(
        _apply_kernel,
        out_shape=jax.ShapeDtypeStruct((m_pad, cp), out_dtype),
        grid=(m_pad // tm,),
        in_specs=[
            pl.BlockSpec((tm, k), lambda i: (i, 0)),
            pl.BlockSpec((k, cp), lambda i: (0, 0)),
            pl.BlockSpec((1, cp), lambda i: (0, 0)),
            pl.BlockSpec((1, cp), lambda i: (0, 0)),
            pl.BlockSpec((1, cp), lambda i: (0, 0)),
        ],
        out_specs=pl.BlockSpec((tm, cp), lambda i: (i, 0)),
        compiler_params=pltpu.CompilerParams(
            dimension_semantics=("parallel",),
            vmem_limit_bytes=vmem_limit),
    )(patches, w_mat, bias_p, scale_p, shift_p)

    out = out_flat[:m, :cout].reshape(n, h, w, cout)
    return jnp.transpose(out, (0, 3, 1, 2))                     # back to NCHW


def reference(x_nchw, w_oihw, bias, gamma, beta, u):
    # Pure-JAX f32 reference for verification.
    w_sn = spectral_normalize(w_oihw, u)
    y = jax.lax.conv_general_dilated(
        x_nchw, w_sn, window_strides=(1, 1), padding="SAME",
        dimension_numbers=("NCHW", "OIHW", "NCHW"))
    y = y + bias[None, :, None, None]
    y = jnp.maximum(y, 0.0)
    mean = jnp.mean(y, axis=(0, 2, 3), keepdims=True)
    var = jnp.mean(jnp.square(y - mean), axis=(0, 2, 3), keepdims=True)
    y = (y - mean) * jax.lax.rsqrt(var + BN_EPS)
    return gamma[None, :, None, None] * y + beta[None, :, None, None]


def _make_inputs(key, n, cin, cout, hw):
    k_x, k_w, k_b, k_g, k_beta, k_u = jax.random.split(key, 6)
    x = jax.random.normal(k_x, (n, cin, hw, hw), dtype=jnp.float32)
    conv_w = jax.random.normal(k_w, (cout, cin, 3, 3), dtype=jnp.float32) * 0.2
    conv_b = jax.random.normal(k_b, (cout,), dtype=jnp.float32) * 0.1
    bn_gamma = 1.0 + 0.1 * jax.random.normal(k_g, (cout,), dtype=jnp.float32)
    bn_beta = 0.1 * jax.random.normal(k_beta, (cout,), dtype=jnp.float32)
    sn_u = jax.random.normal(k_u, (cout,), dtype=jnp.float32)
    sn_u = sn_u / (jnp.linalg.norm(sn_u) + 1e-12)
    return x, conv_w, conv_b, bn_gamma, bn_beta, sn_u


if __name__ == "__main__":
    key = jax.random.PRNGKey(0)
    k1, k2 = jax.random.split(key, 2)

    # ---- case 1: f32 streams, tight check (single row tile, nsplit=1) ----
    args1 = _make_inputs(k1, n=2, cin=4, cout=8, hw=16)
    fwd_f32 = jax.jit(functools.partial(sparse_conv_block, compute_dtype=jnp.float32))
    out1 = jax.block_until_ready(fwd_f32(*args1))
    ref1 = jax.block_until_ready(reference(*args1))
    assert out1.shape == (2, 8, 16, 16)
    assert jnp.allclose(out1, ref1, atol=1e-4, rtol=1e-4), float(jnp.max(jnp.abs(out1 - ref1)))

    # ---- case 2: bf16 patch/weight streams (production path), multi-tile grid with the
    #      2-way parallel stats split and padded last tile; f32 accumulation throughout,
    #      so only the bf16 input rounding loosens the check. ----
    args2 = _make_inputs(k2, n=4, cin=8, cout=16, hw=30)
    fwd_bf16 = jax.jit(functools.partial(sparse_conv_block, compute_dtype=jnp.bfloat16))
    out2 = jax.block_until_ready(fwd_bf16(*args2))
    ref2 = jax.block_until_ready(reference(*args2))
    assert out2.shape == (4, 16, 30, 30)
    assert jnp.allclose(out2, ref2, atol=1e-1, rtol=5e-2), float(jnp.max(jnp.abs(out2 - ref2)))

    print("KERNEL_OK")
</pallas_src>

<mosaic_0001>
module attributes {stable_mosaic.version = 11 : i64} {
  func.func @_apply_kernel(%arg0: i32, %arg1: memref<512x36xf32, #tpu.memory_space<vmem>>, %arg2: memref<36x128xf32, #tpu.memory_space<vmem>>, %arg3: memref<1x128xf32, #tpu.memory_space<vmem>>, %arg4: memref<1x128xf32, #tpu.memory_space<vmem>>, %arg5: memref<1x128xf32, #tpu.memory_space<vmem>>, %arg6: memref<512x128xf32, #tpu.memory_space<vmem>>) attributes {dimension_semantics = [#tpu.dimension_semantics<parallel>], iteration_bounds = array<i64: 1>, scalar_prefetch = 0 : i64, scratch_operands = 0 : i64, tpu.core_type = #tpu.core_type<tc>, window_params = [{transform_indices = @transform_0, window_bounds = array<i64: 512, 36>}, {pipeline_mode = #tpu.pipeline_mode<synchronous>, transform_indices = @transform_1, window_bounds = array<i64: 36, 128>}, {pipeline_mode = #tpu.pipeline_mode<synchronous>, transform_indices = @transform_2, window_bounds = array<i64: 1, 128>}, {pipeline_mode = #tpu.pipeline_mode<synchronous>, transform_indices = @transform_3, window_bounds = array<i64: 1, 128>}, {pipeline_mode = #tpu.pipeline_mode<synchronous>, transform_indices = @transform_4, window_bounds = array<i64: 1, 128>}, {transform_indices = @transform_5, window_bounds = array<i64: 512, 128>}]} {
    %c0 = arith.constant 0 : index
    %c0_0 = arith.constant 0 : index
    %0 = vector.load %arg1[%c0, %c0_0] : memref<512x36xf32, #tpu.memory_space<vmem>>, vector<512x36xf32>
    %c0_1 = arith.constant 0 : index
    %c0_2 = arith.constant 0 : index
    %1 = vector.load %arg2[%c0_1, %c0_2] : memref<36x128xf32, #tpu.memory_space<vmem>>, vector<36x128xf32>
    %cst = arith.constant dense<0.000000e+00> : vector<512x128xf32>
    %2 = tpu.matmul %0, %1, %cst {dimension_numbers = #tpu.dot_dimension_numbers<[1], [0], [0], [1], [0, 0, 1, 1], [], []>} : vector<512x36xf32>, vector<36x128xf32>, vector<512x128xf32> -> vector<512x128xf32>
    %c0_3 = arith.constant 0 : index
    %c0_4 = arith.constant 0 : index
    %3 = vector.load %arg3[%c0_3, %c0_4] : memref<1x128xf32, #tpu.memory_space<vmem>>, vector<1x128xf32>
    %4 = vector.broadcast %3 : vector<1x128xf32> to vector<512x128xf32>
    %5 = arith.addf %2, %4 : vector<512x128xf32>
    %cst_5 = arith.constant 0.000000e+00 : f32
    %6 = vector.broadcast %cst_5 : f32 to vector<512x128xf32>
    %7 = arith.maximumf %5, %6 : vector<512x128xf32>
    %c0_6 = arith.constant 0 : index
    %c0_7 = arith.constant 0 : index
    %8 = vector.load %arg4[%c0_6, %c0_7] : memref<1x128xf32, #tpu.memory_space<vmem>>, vector<1x128xf32>
    %9 = vector.broadcast %8 : vector<1x128xf32> to vector<512x128xf32>
    %10 = arith.mulf %7, %9 : vector<512x128xf32>
    %c0_8 = arith.constant 0 : index
    %c0_9 = arith.constant 0 : index
    %11 = vector.load %arg5[%c0_8, %c0_9] : memref<1x128xf32, #tpu.memory_space<vmem>>, vector<1x128xf32>
    %12 = vector.broadcast %11 : vector<1x128xf32> to vector<512x128xf32>
    %13 = arith.addf %10, %12 : vector<512x128xf32>
    %c0_10 = arith.constant 0 : index
    %c0_11 = arith.constant 0 : index
    %14 = vector.load %arg6[%c0_10, %c0_11] : memref<512x128xf32, #tpu.memory_space<vmem>>, vector<512x128xf32>
    tpu.vector_store %arg6[%c0_10, %c0_11], %13 {strides = array<i32>} : memref<512x128xf32, #tpu.memory_space<vmem>>, vector<512x128xf32>,
    return
  }
  func.func @transform_0(%arg0: i32) -> (i32, i32) {
    %c0_i32 = arith.constant 0 : i32
    %c0_i32_0 = arith.constant 0 : i32
    return %arg0, %c0_i32 : i32, i32
  }
  func.func @transform_1(%arg0: i32) -> (i32, i32) {
    %c0_i32 = arith.constant 0 : i32
    %c0_i32_0 = arith.constant 0 : i32
    %c0_i32_1 = arith.constant 0 : i32
    return %c0_i32, %c0_i32_0 : i32, i32
  }
  func.func @transform_2(%arg0: i32) -> (i32, i32) {
    %c0_i32 = arith.constant 0 : i32
    %c0_i32_0 = arith.constant 0 : i32
    %c0_i32_1 = arith.constant 0 : i32
    return %c0_i32, %c0_i32_0 : i32, i32
  }
  func.func @transform_3(%arg0: i32) -> (i32, i32) {
    %c0_i32 = arith.constant 0 : i32
    %c0_i32_0 = arith.constant 0 : i32
    %c0_i32_1 = arith.constant 0 : i32
    return %c0_i32, %c0_i32_0 : i32, i32
  }
  func.func @transform_4(%arg0: i32) -> (i32, i32) {
    %c0_i32 = arith.constant 0 : i32
    %c0_i32_0 = arith.constant 0 : i32
    %c0_i32_1 = arith.constant 0 : i32
    return %c0_i32, %c0_i32_0 : i32, i32
  }
  func.func @transform_5(%arg0: i32) -> (i32, i32) {
    %c0_i32 = arith.constant 0 : i32
    %c0_i32_0 = arith.constant 0 : i32
    return %arg0, %c0_i32 : i32, i32
  }
}

module attributes {stable_mosaic.version = 11 : i64} {
  func.func @_stats_kernel(%arg0: i32, %arg1: i32, %arg2: memref<512x36xf32, #tpu.memory_space<vmem>>, %arg3: memref<36x128xf32, #tpu.memory_space<vmem>>, %arg4: memref<1x128xf32, #tpu.memory_space<vmem>>, %arg5: memref<1x1x128xf32, #tpu.memory_space<vmem>>, %arg6: memref<1x1x128xf32, #tpu.memory_space<vmem>>) attributes {dimension_semantics = [#tpu.dimension_semantics<parallel>, #tpu.dimension_semantics<arbitrary>], iteration_bounds = array<i64: 1, 1>, scalar_prefetch = 0 : i64, scratch_operands = 0 : i64, tpu.core_type = #tpu.core_type<tc>, window_params = [{transform_indices = @transform_0, window_bounds = array<i64: 512, 36>}, {pipeline_mode = #tpu.pipeline_mode<synchronous>, transform_indices = @transform_1, window_bounds = array<i64: 36, 128>}, {pipeline_mode = #tpu.pipeline_mode<synchronous>, transform_indices = @transform_2, window_bounds = array<i64: 1, 128>}, {transform_indices = @transform_3, window_bounds = array<i64: 1, 1, 128>}, {transform_indices = @transform_4, window_bounds = array<i64: 1, 1, 128>}]} {
    %c0_i32 = arith.constant 0 : i32
    %0 = arith.cmpi eq, %arg1, %c0_i32 : i32
    %1 = arith.extui %0 : i1 to i32
    %c0_i32_0 = arith.constant 0 : i32
    %2 = arith.cmpi ne, %1, %c0_i32_0 : i32
    scf.if %2 {
      %cst_22 = arith.constant 0.000000e+00 : f32
      %23 = vector.broadcast %cst_22 : f32 to vector<1x1x128xf32>
      %c0_23 = arith.constant 0 : index
      %c0_24 = arith.constant 0 : index
      %c0_25 = arith.constant 0 : index
      %24 = vector.load %arg5[%c0_23, %c0_24, %c0_25] : memref<1x1x128xf32, #tpu.memory_space<vmem>>, vector<1x1x128xf32>
      tpu.vector_store %arg5[%c0_23, %c0_24, %c0_25], %23 {strides = array<i32>} : memref<1x1x128xf32, #tpu.memory_space<vmem>>, vector<1x1x128xf32>,
      %cst_26 = arith.constant 0.000000e+00 : f32
      %25 = vector.broadcast %cst_26 : f32 to vector<1x1x128xf32>
      %c0_27 = arith.constant 0 : index
      %c0_28 = arith.constant 0 : index
      %c0_29 = arith.constant 0 : index
      %26 = vector.load %arg6[%c0_27, %c0_28, %c0_29] : memref<1x1x128xf32, #tpu.memory_space<vmem>>, vector<1x1x128xf32>
      tpu.vector_store %arg6[%c0_27, %c0_28, %c0_29], %25 {strides = array<i32>} : memref<1x1x128xf32, #tpu.memory_space<vmem>>, vector<1x1x128xf32>,
    } else {
    }
    %c0 = arith.constant 0 : index
    %c0_1 = arith.constant 0 : index
    %3 = vector.load %arg2[%c0, %c0_1] : memref<512x36xf32, #tpu.memory_space<vmem>>, vector<512x36xf32>
    %c0_2 = arith.constant 0 : index
    %c0_3 = arith.constant 0 : index
    %4 = vector.load %arg3[%c0_2, %c0_3] : memref<36x128xf32, #tpu.memory_space<vmem>>, vector<36x128xf32>
    %cst = arith.constant dense<0.000000e+00> : vector<512x128xf32>
    %5 = tpu.matmul %3, %4, %cst {dimension_numbers = #tpu.dot_dimension_numbers<[1], [0], [0], [1], [0, 0, 1, 1], [], []>} : vector<512x36xf32>, vector<36x128xf32>, vector<512x128xf32> -> vector<512x128xf32>
    %c0_4 = arith.constant 0 : index
    %c0_5 = arith.constant 0 : index
    %6 = vector.load %arg4[%c0_4, %c0_5] : memref<1x128xf32, #tpu.memory_space<vmem>>, vector<1x128xf32>
    %7 = vector.broadcast %6 : vector<1x128xf32> to vector<512x128xf32>
    %8 = arith.addf %5, %7 : vector<512x128xf32>
    %cst_6 = arith.constant 0.000000e+00 : f32
    %9 = vector.broadcast %cst_6 : f32 to vector<512x128xf32>
    %10 = arith.maximumf %8, %9 : vector<512x128xf32>
    %cst_7 = arith.constant 1.000000e+00 : f32
    %11 = vector.broadcast %cst_7 : f32 to vector<1x512xf32>
    %cst_8 = arith.constant dense<0.000000e+00> : vector<1x128xf32>
    %12 = tpu.matmul %11, %10, %cst_8 {dimension_numbers = #tpu.dot_dimension_numbers<[1], [0], [0], [1], [0, 0, 1, 1], [], []>} : vector<1x512xf32>, vector<512x128xf32>, vector<1x128xf32> -> vector<1x128xf32>
    %13 = arith.mulf %10, %10 : vector<512x128xf32>
    %cst_9 = arith.constant dense<0.000000e+00> : vector<1x128xf32>
    %14 = tpu.matmul %11, %13, %cst_9 {dimension_numbers = #tpu.dot_dimension_numbers<[1], [0], [0], [1], [0, 0, 1, 1], [], []>} : vector<1x512xf32>, vector<512x128xf32>, vector<1x128xf32> -> vector<1x128xf32>
    %c0_10 = arith.constant 0 : index
    %c0_11 = arith.constant 0 : index
    %c0_12 = arith.constant 0 : index
    %15 = vector.load %arg5[%c0_10, %c0_11, %c0_12] : memref<1x1x128xf32, #tpu.memory_space<vmem>>, vector<1x1x128xf32>
    %16 = vector.shape_cast %12 : vector<1x128xf32> to vector<1x1x128xf32>
    %17 = arith.addf %15, %16 : vector<1x1x128xf32>
    %c0_13 = arith.constant 0 : index
    %c0_14 = arith.constant 0 : index
    %c0_15 = arith.constant 0 : index
    %18 = vector.load %arg5[%c0_13, %c0_14, %c0_15] : memref<1x1x128xf32, #tpu.memory_space<vmem>>, vector<1x1x128xf32>
    tpu.vector_store %arg5[%c0_13, %c0_14, %c0_15], %17 {strides = array<i32>} : memref<1x1x128xf32, #tpu.memory_space<vmem>>, vector<1x1x128xf32>,
    %c0_16 = arith.constant 0 : index
    %c0_17 = arith.constant 0 : index
    %c0_18 = arith.constant 0 : index
    %19 = vector.load %arg6[%c0_16, %c0_17, %c0_18] : memref<1x1x128xf32, #tpu.memory_space<vmem>>, vector<1x1x128xf32>
    %20 = vector.shape_cast %14 : vector<1x128xf32> to vector<1x1x128xf32>
    %21 = arith.addf %19, %20 : vector<1x1x128xf32>
    %c0_19 = arith.constant 0 : index
    %c0_20 = arith.constant 0 : index
    %c0_21 = arith.constant 0 : index
    %22 = vector.load %arg6[%c0_19, %c0_20, %c0_21] : memref<1x1x128xf32, #tpu.memory_space<vmem>>, vector<1x1x128xf32>
    tpu.vector_store %arg6[%c0_19, %c0_20, %c0_21], %21 {strides = array<i32>} : memref<1x1x128xf32, #tpu.memory_space<vmem>>, vector<1x1x128xf32>,
    return
  }
  func.func @transform_0(%arg0: i32, %arg1: i32) -> (i32, i32) {
    %c1_i32 = arith.constant 1 : i32
    %0 = arith.muli %arg0, %c1_i32 : i32
    %1 = arith.addi %0, %arg1 : i32
    %c0_i32 = arith.constant 0 : i32
    %c0_i32_0 = arith.constant 0 : i32
    return %1, %c0_i32 : i32, i32
  }
  func.func @transform_1(%arg0: i32, %arg1: i32) -> (i32, i32) {
    %c0_i32 = arith.constant 0 : i32
    %c0_i32_0 = arith.constant 0 : i32
    %c0_i32_1 = arith.constant 0 : i32
    return %c0_i32, %c0_i32_0 : i32, i32
  }
  func.func @transform_2(%arg0: i32, %arg1: i32) -> (i32, i32) {
    %c0_i32 = arith.constant 0 : i32
    %c0_i32_0 = arith.constant 0 : i32
    %c0_i32_1 = arith.constant 0 : i32
    return %c0_i32, %c0_i32_0 : i32, i32
  }
  func.func @transform_3(%arg0: i32, %arg1: i32) -> (i32, i32, i32) {
    %c0_i32 = arith.constant 0 : i32
    %c0_i32_0 = arith.constant 0 : i32
    %c0_i32_1 = arith.constant 0 : i32
    return %arg0, %c0_i32, %c0_i32_0 : i32, i32, i32
  }
  func.func @transform_4(%arg0: i32, %arg1: i32) -> (i32, i32, i32) {
    %c0_i32 = arith.constant 0 : i32
    %c0_i32_0 = arith.constant 0 : i32
    %c0_i32_1 = arith.constant 0 : i32
    return %arg0, %c0_i32, %c0_i32_0 : i32, i32, i32
  }
}

</mosaic_0001>

<llo_original>
// kernel: sparse_conv_block.2
$region0: #{sparse_conv_block.2}
  #allocation0 [shape = 'u32[]', space=smem, size = 0x4, offset = 0x4, fixed_abs, tag = 'smem constant byte address 0x4 - core index']
  #allocation1 [shape = 'u32[144,128]{1,0:T(1,128)}', space=vmem, size = 0x12000, scoped, tag = 'internal scratch']
  %s0 = inlined_call_operand.vmem [shape: f32[512,36], index: 0, kind: input, shape index: {}]
  %s1 = inlined_call_operand.vmem [shape: f32[36,128], index: 1, kind: input, shape index: {}]
  %s2 = inlined_call_operand.vmem [shape: f32[1,128], index: 2, kind: input, shape index: {}]
  %s3 = inlined_call_operand.vmem [shape: f32[1,1,128], index: 3, kind: output, shape index: {0}]
  %s4 = inlined_call_operand.vmem [shape: f32[1,1,128], index: 4, kind: output, shape index: {1}]
  %5 = xla_tuple %s3, %s4
  %s6 = sld [smem:[#allocation0]]
  $region34: #{sparse_conv_block.2} parent=0
    _
  %s8 = ssub.s32 1, %s6
  %s9 = scalar_select 0, %s8, %s6
  // Predicated region
  $region2: #{sparse_conv_block.2} parent=0 // pred_check
    _
  $region3: #{sparse_conv_block.2} parent=0 // pred_check_branch
    %11 = sbr.rel (0) target = $region5
  $region4: #{sparse_conv_block.2} parent=0 // pred_region
    %s12 = sadd.s32 0, 0
    %s13 = smul.u32 64, %s12
    %p14 = scmp.lt.s32.totalorder %s13, 63
    %s15 = scalar_select %p14, %s13, 63
    %s16 = smul.addr %s15, 8
    %s17 = scalar_lea.vmem %s0, %s16
    %s18 = sadd.s32 0, 0
    %s19 = smul.u32 64, %s18
  $region5: #{sparse_conv_block.2} parent=0 // pred_fallthru
    _
  // Predicated region
  $region6: #{sparse_conv_block.2} parent=0 // pred_check
    _
  $region7: #{sparse_conv_block.2} parent=0 // pred_check_branch
    %21 = sbr.rel (0) target = $region9
  $region8: #{sparse_conv_block.2} parent=0 // pred_region
    _
  $region9: #{sparse_conv_block.2} parent=0 // pred_fallthru
    _
  // Predicated region
  $region10: #{sparse_conv_block.2} parent=0 // pred_check
    _
  $region11: #{sparse_conv_block.2} parent=0 // pred_check_branch
    %23 = sbr.rel (0) target = $region13
  $region12: #{sparse_conv_block.2} parent=0 // pred_region
    _
  $region13: #{sparse_conv_block.2} parent=0 // pred_fallthru
    _
  %s24 = sadd.s32 0, 0
  %s25 = smul.u32 64, %s24
  %p26 = scmp.lt.s32.totalorder %s25, 63
  %s27 = scalar_select %p26, %s25, 63
  %s28 = smul.addr %s27, 8
  %s29 = scalar_lea.vmem %s0, %s28
  %s30 = sadd.s32 0, 0
  %s31 = smul.u32 64, %s30
  %p32 = scmp.lt.s32.totalorder %s31, 63
  %s33 = scalar_select %p32, %s31, 63
  %s34 = smul.addr %s33, 8
  %s35 = scalar_lea.vmem %s0, %s34
  %s36 = sadd.s32 0, 0
  %s37 = smul.u32 64, %s36
  %p38 = scmp.eq.s32.totalorder 0, 0
  // Predicated region
  $region14: #{sparse_conv_block.2} parent=0 // pred_check
    %p39 = pneg %p38
  $region15: #{sparse_conv_block.2} parent=0 // pred_check_branch
    %41 = sbr.rel (%p39) target = $region17
  $region16: #{sparse_conv_block.2} parent=0 // pred_region
    %42 = vst [vmem:[%s3] sm:$0x1] 0.0
    %43 = vst [vmem:[%s4] sm:$0x1] 0.0
  $region17: #{sparse_conv_block.2} parent=0 // pred_fallthru
    _
  %v44 = vld [vmem:[%s35] sm:$0xff]
  %v45 = vld [vmem:[%s35 + $0x8] sm:$0xff]
  %v46 = vld [vmem:[%s35 + $0x10] sm:$0xff]
  %v47 = vld [vmem:[%s35 + $0x18] sm:$0xff]
  %v48 = vld [vmem:[%s35 + $0x20] sm:$0xff]
  %v49 = vld [vmem:[%s35 + $0x28] sm:$0xff]
  %v50 = vld [vmem:[%s35 + $0x30] sm:$0xff]
  %v51 = vld [vmem:[%s35 + $0x38] sm:$0xff]
  %v52 = vld [vmem:[%s35 + $0x40] sm:$0xff]
  %v53 = vld [vmem:[%s35 + $0x48] sm:$0xff]
  %v54 = vld [vmem:[%s35 + $0x50] sm:$0xff]
  %v55 = vld [vmem:[%s35 + $0x58] sm:$0xff]
  %v56 = vld [vmem:[%s35 + $0x60] sm:$0xff]
  %v57 = vld [vmem:[%s35 + $0x68] sm:$0xff]
  %v58 = vld [vmem:[%s35 + $0x70] sm:$0xff]
  %v59 = vld [vmem:[%s35 + $0x78] sm:$0xff]
  %v60 = vld [vmem:[%s35 + $0x80] sm:$0xff]
  %v61 = vld [vmem:[%s35 + $0x88] sm:$0xff]
  %v62 = vld [vmem:[%s35 + $0x90] sm:$0xff]
  %v63 = vld [vmem:[%s35 + $0x98] sm:$0xff]
  %v64 = vld [vmem:[%s35 + $0xa0] sm:$0xff]
  %v65 = vld [vmem:[%s35 + $0xa8] sm:$0xff]
  %v66 = vld [vmem:[%s35 + $0xb0] sm:$0xff]
  %v67 = vld [vmem:[%s35 + $0xb8] sm:$0xff]
  %v68 = vld [vmem:[%s35 + $0xc0] sm:$0xff]
  %v69 = vld [vmem:[%s35 + $0xc8] sm:$0xff]
  %v70 = vld [vmem:[%s35 + $0xd0] sm:$0xff]
  %v71 = vld [vmem:[%s35 + $0xd8] sm:$0xff]
  %v72 = vld [vmem:[%s35 + $0xe0] sm:$0xff]
  %v73 = vld [vmem:[%s35 + $0xe8] sm:$0xff]
  %v74 = vld [vmem:[%s35 + $0xf0] sm:$0xff]
  %v75 = vld [vmem:[%s35 + $0xf8] sm:$0xff]
  %v76 = vld [vmem:[%s35 + $0x100] sm:$0xff]
  %v77 = vld [vmem:[%s35 + $0x108] sm:$0xff]
  %v78 = vld [vmem:[%s35 + $0x110] sm:$0xff]
  %v79 = vld [vmem:[%s35 + $0x118] sm:$0xff]
  %v80 = vld [vmem:[%s35 + $0x120] sm:$0xff]
  %v81 = vld [vmem:[%s35 + $0x128] sm:$0xff]
  %v82 = vld [vmem:[%s35 + $0x130] sm:$0xff]
  %v83 = vld [vmem:[%s35 + $0x138] sm:$0xff]
  %v84 = vld [vmem:[%s35 + $0x140] sm:$0xff]
  %v85 = vld [vmem:[%s35 + $0x148] sm:$0xff]
  %v86 = vld [vmem:[%s35 + $0x150] sm:$0xff]
  %v87 = vld [vmem:[%s35 + $0x158] sm:$0xff]
  %v88 = vld [vmem:[%s35 + $0x160] sm:$0xff]
  %v89 = vld [vmem:[%s35 + $0x168] sm:$0xff]
  %v90 = vld [vmem:[%s35 + $0x170] sm:$0xff]
  %v91 = vld [vmem:[%s35 + $0x178] sm:$0xff]
  %v92 = vld [vmem:[%s35 + $0x180] sm:$0xff]
  %v93 = vld [vmem:[%s35 + $0x188] sm:$0xff]
  %v94 = vld [vmem:[%s35 + $0x190] sm:$0xff]
  %v95 = vld [vmem:[%s35 + $0x198] sm:$0xff]
  %v96 = vld [vmem:[%s35 + $0x1a0] sm:$0xff]
  %v97 = vld [vmem:[%s35 + $0x1a8] sm:$0xff]
  %v98 = vld [vmem:[%s35 + $0x1b0] sm:$0xff]
  %v99 = vld [vmem:[%s35 + $0x1b8] sm:$0xff]
  %v100 = vld [vmem:[%s35 + $0x1c0] sm:$0xff]
  %v101 = vld [vmem:[%s35 + $0x1c8] sm:$0xff]
  %v102 = vld [vmem:[%s35 + $0x1d0] sm:$0xff]
  %v103 = vld [vmem:[%s35 + $0x1d8] sm:$0xff]
  %v104 = vld [vmem:[%s35 + $0x1e0] sm:$0xff]
  %v105 = vld [vmem:[%s35 + $0x1e8] sm:$0xff]
  %v106 = vld [vmem:[%s35 + $0x1f0] sm:$0xff]
  %v107 = vld [vmem:[%s35 + $0x1f8] sm:$0xff]
  %v108 = vld [vmem:[%s1] sm:$0xff]
  %v109 = vld [vmem:[%s1 + $0x8] sm:$0xff]
  %v110 = vld [vmem:[%s1 + $0x10] sm:$0xff]
  %v111 = vld [vmem:[%s1 + $0x18] sm:$0xff]
  %v112 = vld [vmem:[%s1 + $0x20] sm:$0xf]
  %v113 = vld [vmem:[%s2] sm:$0x1]
  %v115 = vlaneseq
  %v116 = vshrl.u32 %v115, 7
  %v117 = vsub.s32 0, %v116
  %v118 = vrot.slane %v113, %v117
  %vm120 = vcmask 293888
  %v122 = vsel %vm120, %v44, 0
  %v125 = vsel %vm120, %v45, 0
  %v128 = vsel %vm120, %v46, 0
  %v131 = vsel %vm120, %v47, 0
  %v134 = vsel %vm120, %v48, 0
  %v137 = vsel %vm120, %v49, 0
  %v140 = vsel %vm120, %v50, 0
  %v143 = vsel %vm120, %v51, 0
  %v146 = vsel %vm120, %v52, 0
  %v149 = vsel %vm120, %v53, 0
  %v152 = vsel %vm120, %v54, 0
  %v155 = vsel %vm120, %v55, 0
  %v158 = vsel %vm120, %v56, 0
  %v161 = vsel %vm120, %v57, 0
  %v164 = vsel %vm120, %v58, 0
  %v167 = vsel %vm120, %v59, 0
  %v170 = vsel %vm120, %v60, 0
  %v173 = vsel %vm120, %v61, 0
  %v176 = vsel %vm120, %v62, 0
  %v179 = vsel %vm120, %v63, 0
  %v182 = vsel %vm120, %v64, 0
  %v185 = vsel %vm120, %v65, 0
  %v188 = vsel %vm120, %v66, 0
  %v191 = vsel %vm120, %v67, 0
  %v194 = vsel %vm120, %v68, 0
  %v197 = vsel %vm120, %v69, 0
  %v200 = vsel %vm120, %v70, 0
  %v203 = vsel %vm120, %v71, 0
  %v206 = vsel %vm120, %v72, 0
  %v209 = vsel %vm120, %v73, 0
  %v212 = vsel %vm120, %v74, 0
  %v215 = vsel %vm120, %v75, 0
  %v218 = vsel %vm120, %v76, 0
  %v221 = vsel %vm120, %v77, 0
  %v224 = vsel %vm120, %v78, 0
  %v227 = vsel %vm120, %v79, 0
  %v230 = vsel %vm120, %v80, 0
  %v233 = vsel %vm120, %v81, 0
  %v236 = vsel %vm120, %v82, 0
  %v239 = vsel %vm120, %v83, 0
  %v242 = vsel %vm120, %v84, 0
  %v245 = vsel %vm120, %v85, 0
  %v248 = vsel %vm120, %v86, 0
  %v251 = vsel %vm120, %v87, 0
  %v254 = vsel %vm120, %v88, 0
  %v257 = vsel %vm120, %v89, 0
  %v260 = vsel %vm120, %v90, 0
  %v263 = vsel %vm120, %v91, 0
  %v266 = vsel %vm120, %v92, 0
  %v269 = vsel %vm120, %v93, 0
  %v272 = vsel %vm120, %v94, 0
  %v275 = vsel %vm120, %v95, 0
  %v278 = vsel %vm120, %v96, 0
  %v281 = vsel %vm120, %v97, 0
  %v284 = vsel %vm120, %v98, 0
  %v287 = vsel %vm120, %v99, 0
  %v290 = vsel %vm120, %v100, 0
  %v293 = vsel %vm120, %v101, 0
  %v296 = vsel %vm120, %v102, 0
  %v299 = vsel %vm120, %v103, 0
  %v302 = vsel %vm120, %v104, 0
  %v305 = vsel %vm120, %v105, 0
  %v308 = vsel %vm120, %v106, 0
  %v311 = vsel %vm120, %v107, 0
  %vm313 = vcmask 1043456
  %v315 = vsel %vm313, %v112, 0
  %317 = vmatprep.subr.mxu0 0.0
  %318 = vmatpush1.msra.mxu0 %v108
  %319 = vmatprep.subr.mxu0 0.0
  %320 = vmatpush1.msra.mxu0 %v109
  %321 = vmatprep.subr.mxu0 0.0
  %322 = vmatpush1.msra.mxu0 %v110
  %323 = vmatprep.subr.mxu0 0.0
  %324 = vmatpush1.msra.mxu0 %v111
  %325 = vmatprep.subr.mxu0 0.0
  %326 = vmatpush1.msra.mxu0 %v315
  %327 = vmatprep.subr.mxu0 0.0
  %328 = vmatpush1.msra.mxu0 0.0
  %329 = vmatprep.subr.mxu0 0.0
  %330 = vmatpush1.msra.mxu0 0.0
  %331 = vmatprep.subr.mxu0 0.0
  %332 = vmatpush1.msra.mxu0 0.0
  %333 = vmatprep.subr.mxu0 0.0
  %334 = vmatpush1.msra.mxu0 0.0
  %335 = vmatprep.subr.mxu0 0.0
  %336 = vmatpush1.msra.mxu0 0.0
  %337 = vmatprep.subr.mxu0 0.0
  %338 = vmatpush1.msra.mxu0 0.0
  %339 = vmatprep.subr.mxu0 0.0
  %340 = vmatpush1.msra.mxu0 0.0
  %341 = vmatprep.subr.mxu0 0.0
  %342 = vmatpush1.msra.mxu0 0.0
  %343 = vmatprep.subr.mxu0 0.0
  %344 = vmatpush1.msra.mxu0 0.0
  %345 = vmatprep.subr.mxu0 0.0
  %346 = vmatpush1.msra.mxu0 0.0
  %347 = vmatprep.subr.mxu0 0.0
  %348 = vmatpush1.msra.mxu0 0.0
  %349 = vmatprep.subr.mxu0 0.0
  %350 = vmatpush1.msra.mxu0 0.0
  %351 = vmatprep.subr.mxu0 0.0
  %352 = vmatpush1.msra.mxu0 0.0
  %353 = vmatprep.subr.mxu0 0.0
  %354 = vmatpush1.msra.mxu0 0.0
  %355 = vmatprep.subr.mxu0 0.0
  %356 = vmatpush1.msra.mxu0 0.0
  %357 = vmatprep.subr.mxu0 0.0
  %358 = vmatpush1.msra.mxu0 0.0
  %359 = vmatprep.subr.mxu0 0.0
  %360 = vmatpush1.msra.mxu0 0.0
  %361 = vmatprep.subr.mxu0 0.0
  %362 = vmatpush1.msra.mxu0 0.0
  %363 = vmatprep.subr.mxu0 0.0
  %364 = vmatpush1.msra.mxu0 0.0
  %365 = vmatprep.subr.mxu0 0.0
  %366 = vmatpush1.msra.mxu0 0.0
  %367 = vmatprep.subr.mxu0 0.0
  %368 = vmatpush1.msra.mxu0 0.0
  %369 = vmatprep.subr.mxu0 0.0
  %370 = vmatpush1.msra.mxu0 0.0
  %371 = vmatprep.subr.mxu0 0.0
  %372 = vmatpush1.msra.mxu0 0.0
  %373 = vmatprep.subr.mxu0 0.0
  %374 = vmatpush1.msra.mxu0 0.0
  %375 = vmatprep.subr.mxu0 0.0
  %376 = vmatpush1.msra.mxu0 0.0
  %377 = vmatprep.subr.mxu0 0.0
  %378 = vmatpush1.msra.mxu0 0.0
  %379 = vmatprep.subr.mxu0 0.0
  %380 = vmatpush1.msra.mxu0 0.0
  %381 = vmatprep.mubr.f32.mxu0 0.0
  %382 = vmatmul.mubr.f32.gmra.mrb[0].mxu0 %v122
  %v383 = vpop.f32.mrb[0].mxu0
  %v384 = vadd.f32 %v118, %v383
  %v385 = vpop.f32.mrb[0].mxu0
  %386 = vmatprep.mubr.f32.mxu0 0.0
  %387 = vmatmul.mubr.f32.gmra.mrb[0].mxu0 %v125
  %v388 = vpop.f32.mrb[0].mxu0
  %v389 = vadd.f32 %v118, %v388
  %v390 = vpop.f32.mrb[0].mxu0
  %391 = vmatprep.mubr.f32.mxu0 0.0
  %392 = vmatmul.mubr.f32.gmra.mrb[0].mxu0 %v128
  %v393 = vpop.f32.mrb[0].mxu0
  %v394 = vadd.f32 %v118, %v393
  %v395 = vpop.f32.mrb[0].mxu0
  %396 = vmatprep.mubr.f32.mxu0 0.0
  %397 = vmatmul.mubr.f32.gmra.mrb[0].mxu0 %v131
  %v398 = vpop.f32.mrb[0].mxu0
  %v399 = vadd.f32 %v118, %v398
  %v400 = vpop.f32.mrb[0].mxu0
  %401 = vmatprep.mubr.f32.mxu0 0.0
  %402 = vmatmul.mubr.f32.gmra.mrb[0].mxu0 %v134
  %v403 = vpop.f32.mrb[0].mxu0
  %v404 = vadd.f32 %v118, %v403
  %v405 = vpop.f32.mrb[0].mxu0
  %406 = vmatprep.mubr.f32.mxu0 0.0
  %407 = vmatmul.mubr.f32.gmra.mrb[0].mxu0 %v137
  %v408 = vpop.f32.mrb[0].mxu0
  %v409 = vadd.f32 %v118, %v408
  %v410 = vpop.f32.mrb[0].mxu0
  %411 = vmatprep.mubr.f32.mxu0 0.0
  %412 = vmatmul.mubr.f32.gmra.mrb[0].mxu0 %v140
  %v413 = vpop.f32.mrb[0].mxu0
  %v414 = vadd.f32 %v118, %v413
  %v415 = vpop.f32.mrb[0].mxu0
  %416 = vmatprep.mubr.f32.mxu0 0.0
  %417 = vmatmul.mubr.f32.gmra.mrb[0].mxu0 %v143
  %v418 = vpop.f32.mrb[0].mxu0
  %v419 = vadd.f32 %v118, %v418
  %v420 = vpop.f32.mrb[0].mxu0
  %421 = vmatprep.mubr.f32.mxu0 0.0
  %422 = vmatmul.mubr.f32.gmra.mrb[0].mxu0 %v146
  %v423 = vpop.f32.mrb[0].mxu0
  %v424 = vadd.f32 %v118, %v423
  %v425 = vpop.f32.mrb[0].mxu0
  %426 = vmatprep.mubr.f32.mxu0 0.0
  %427 = vmatmul.mubr.f32.gmra.mrb[0].mxu0 %v149
  %v428 = vpop.f32.mrb[0].mxu0
  %v429 = vadd.f32 %v118, %v428
  %v430 = vpop.f32.mrb[0].mxu0
  %431 = vmatprep.mubr.f32.mxu0 0.0
  %432 = vmatmul.mubr.f32.gmra.mrb[0].mxu0 %v152
  %v433 = vpop.f32.mrb[0].mxu0
  %v434 = vadd.f32 %v118, %v433
  %v435 = vpop.f32.mrb[0].mxu0
  %436 = vmatprep.mubr.f32.mxu0 0.0
  %437 = vmatmul.mubr.f32.gmra.mrb[0].mxu0 %v155
  %v438 = vpop.f32.mrb[0].mxu0
  %v439 = vadd.f32 %v118, %v438
  %v440 = vpop.f32.mrb[0].mxu0
  %441 = vmatprep.mubr.f32.mxu0 0.0
  %442 = vmatmul.mubr.f32.gmra.mrb[0].mxu0 %v158
  %v443 = vpop.f32.mrb[0].mxu0
  %v444 = vadd.f32 %v118, %v443
  %v445 = vpop.f32.mrb[0].mxu0
  %446 = vmatprep.mubr.f32.mxu0 0.0
  %447 = vmatmul.mubr.f32.gmra.mrb[0].mxu0 %v161
  %v448 = vpop.f32.mrb[0].mxu0
  %v449 = vadd.f32 %v118, %v448
  %v450 = vpop.f32.mrb[0].mxu0
  %451 = vmatprep.mubr.f32.mxu0 0.0
  %452 = vmatmul.mubr.f32.gmra.mrb[0].mxu0 %v164
  %v453 = vpop.f32.mrb[0].mxu0
  %v454 = vadd.f32 %v118, %v453
  %v455 = vpop.f32.mrb[0].mxu0
  %456 = vmatprep.mubr.f32.mxu0 0.0
  %457 = vmatmul.mubr.f32.gmra.mrb[0].mxu0 %v167
  %v458 = vpop.f32.mrb[0].mxu0
  %v459 = vadd.f32 %v118, %v458
  %v460 = vpop.f32.mrb[0].mxu0
  %461 = vmatprep.mubr.f32.mxu0 0.0
  %462 = vmatmul.mubr.f32.gmra.mrb[0].mxu0 %v170
  %v463 = vpop.f32.mrb[0].mxu0
  %v464 = vadd.f32 %v118, %v463
  %v465 = vpop.f32.mrb[0].mxu0
  %466 = vmatprep.mubr.f32.mxu0 0.0
  %467 = vmatmul.mubr.f32.gmra.mrb[0].mxu0 %v173
  %v468 = vpop.f32.mrb[0].mxu0
  %v469 = vadd.f32 %v118, %v468
  %v470 = vpop.f32.mrb[0].mxu0
  %471 = vmatprep.mubr.f32.mxu0 0.0
  %472 = vmatmul.mubr.f32.gmra.mrb[0].mxu0 %v176
  %v473 = vpop.f32.mrb[0].mxu0
  %v474 = vadd.f32 %v118, %v473
  %v475 = vpop.f32.mrb[0].mxu0
  %476 = vmatprep.mubr.f32.mxu0 0.0
  %477 = vmatmul.mubr.f32.gmra.mrb[0].mxu0 %v179
  %v478 = vpop.f32.mrb[0].mxu0
  %v479 = vadd.f32 %v118, %v478
  %v480 = vpop.f32.mrb[0].mxu0
  %481 = vmatprep.mubr.f32.mxu0 0.0
  %482 = vmatmul.mubr.f32.gmra.mrb[0].mxu0 %v182
  %v483 = vpop.f32.mrb[0].mxu0
  %v484 = vadd.f32 %v118, %v483
  %v485 = vpop.f32.mrb[0].mxu0
  %486 = vmatprep.mubr.f32.mxu0 0.0
  %487 = vmatmul.mubr.f32.gmra.mrb[0].mxu0 %v185
  %v488 = vpop.f32.mrb[0].mxu0
  %v489 = vadd.f32 %v118, %v488
  %v490 = vpop.f32.mrb[0].mxu0
  %491 = vmatprep.mubr.f32.mxu0 0.0
  %492 = vmatmul.mubr.f32.gmra.mrb[0].mxu0 %v188
  %v493 = vpop.f32.mrb[0].mxu0
  %v494 = vadd.f32 %v118, %v493
  %v495 = vpop.f32.mrb[0].mxu0
  %496 = vmatprep.mubr.f32.mxu0 0.0
  %497 = vmatmul.mubr.f32.gmra.mrb[0].mxu0 %v191
  %v498 = vpop.f32.mrb[0].mxu0
  %v499 = vadd.f32 %v118, %v498
  %v500 = vpop.f32.mrb[0].mxu0
  %501 = vmatprep.mubr.f32.mxu0 0.0
  %502 = vmatmul.mubr.f32.gmra.mrb[0].mxu0 %v194
  %v503 = vpop.f32.mrb[0].mxu0
  %v504 = vadd.f32 %v118, %v503
  %v505 = vpop.f32.mrb[0].mxu0
  %506 = vmatprep.mubr.f32.mxu0 0.0
  %507 = vmatmul.mubr.f32.gmra.mrb[0].mxu0 %v197
  %v508 = vpop.f32.mrb[0].mxu0
  %v509 = vadd.f32 %v118, %v508
  %v510 = vpop.f32.mrb[0].mxu0
  %511 = vmatprep.mubr.f32.mxu0 0.0
  %512 = vmatmul.mubr.f32.gmra.mrb[0].mxu0 %v200
  %v513 = vpop.f32.mrb[0].mxu0
  %v514 = vadd.f32 %v118, %v513
  %v515 = vpop.f32.mrb[0].mxu0
  %516 = vmatprep.mubr.f32.mxu0 0.0
  %517 = vmatmul.mubr.f32.gmra.mrb[0].mxu0 %v203
  %v518 = vpop.f32.mrb[0].mxu0
  %v519 = vadd.f32 %v118, %v518
  %v520 = vpop.f32.mrb[0].mxu0
  %521 = vmatprep.mubr.f32.mxu0 0.0
  %522 = vmatmul.mubr.f32.gmra.mrb[0].mxu0 %v206
  %v523 = vpop.f32.mrb[0].mxu0
  %v524 = vadd.f32 %v118, %v523
  %v525 = vpop.f32.mrb[0].mxu0
  %526 = vmatprep.mubr.f32.mxu0 0.0
  %527 = vmatmul.mubr.f32.gmra.mrb[0].mxu0 %v209
  %v528 = vpop.f32.mrb[0].mxu0
  %v529 = vadd.f32 %v118, %v528
  %v530 = vpop.f32.mrb[0].mxu0
  %531 = vmatprep.mubr.f32.mxu0 0.0
  %532 = vmatmul.mubr.f32.gmra.mrb[0].mxu0 %v212
  %v533 = vpop.f32.mrb[0].mxu0
  %v534 = vadd.f32 %v118, %v533
  %v535 = vpop.f32.mrb[0].mxu0
  %536 = vmatprep.mubr.f32.mxu0 0.0
  %537 = vmatmul.mubr.f32.gmra.mrb[0].mxu0 %v215
  %v538 = vpop.f32.mrb[0].mxu0
  %v539 = vadd.f32 %v118, %v538
  %v540 = vpop.f32.mrb[0].mxu0
  %541 = vmatprep.mubr.f32.mxu0 0.0
  %542 = vmatmul.mubr.f32.gmra.mrb[0].mxu0 %v218
  %v543 = vpop.f32.mrb[0].mxu0
  %v544 = vadd.f32 %v118, %v543
  %v545 = vpop.f32.mrb[0].mxu0
  %546 = vmatprep.mubr.f32.mxu0 0.0
  %547 = vmatmul.mubr.f32.gmra.mrb[0].mxu0 %v221
  %v548 = vpop.f32.mrb[0].mxu0
  %v549 = vadd.f32 %v118, %v548
  %v550 = vpop.f32.mrb[0].mxu0
  %551 = vmatprep.mubr.f32.mxu0 0.0
  %552 = vmatmul.mubr.f32.gmra.mrb[0].mxu0 %v224
  %v553 = vpop.f32.mrb[0].mxu0
  %v554 = vadd.f32 %v118, %v553
  %v555 = vpop.f32.mrb[0].mxu0
  %556 = vmatprep.mubr.f32.mxu0 0.0
  %557 = vmatmul.mubr.f32.gmra.mrb[0].mxu0 %v227
  %v558 = vpop.f32.mrb[0].mxu0
  %v559 = vadd.f32 %v118, %v558
  %v560 = vpop.f32.mrb[0].mxu0
  %561 = vmatprep.mubr.f32.mxu0 0.0
  %562 = vmatmul.mubr.f32.gmra.mrb[0].mxu0 %v230
  %v563 = vpop.f32.mrb[0].mxu0
  %v564 = vadd.f32 %v118, %v563
  %v565 = vpop.f32.mrb[0].mxu0
  %566 = vmatprep.mubr.f32.mxu0 0.0
  %567 = vmatmul.mubr.f32.gmra.mrb[0].mxu0 %v233
  %v568 = vpop.f32.mrb[0].mxu0
  %v569 = vadd.f32 %v118, %v568
  %v570 = vpop.f32.mrb[0].mxu0
  %571 = vmatprep.mubr.f32.mxu0 0.0
  %572 = vmatmul.mubr.f32.gmra.mrb[0].mxu0 %v236
  %v573 = vpop.f32.mrb[0].mxu0
  %v574 = vadd.f32 %v118, %v573
  %v575 = vpop.f32.mrb[0].mxu0
  %576 = vmatprep.mubr.f32.mxu0 0.0
  %577 = vmatmul.mubr.f32.gmra.mrb[0].mxu0 %v239
  %v578 = vpop.f32.mrb[0].mxu0
  %v579 = vadd.f32 %v118, %v578
  %v580 = vpop.f32.mrb[0].mxu0
  %581 = vmatprep.mubr.f32.mxu0 0.0
  %582 = vmatmul.mubr.f32.gmra.mrb[0].mxu0 %v242
  %v583 = vpop.f32.mrb[0].mxu0
  %v584 = vadd.f32 %v118, %v583
  %v585 = vpop.f32.mrb[0].mxu0
  %586 = vmatprep.mubr.f32.mxu0 0.0
  %587 = vmatmul.mubr.f32.gmra.mrb[0].mxu0 %v245
  %v588 = vpop.f32.mrb[0].mxu0
  %v589 = vadd.f32 %v118, %v588
  %v590 = vpop.f32.mrb[0].mxu0
  %591 = vmatprep.mubr.f32.mxu0 0.0
  %592 = vmatmul.mubr.f32.gmra.mrb[0].mxu0 %v248
  %v593 = vpop.f32.mrb[0].mxu0
  %v594 = vadd.f32 %v118, %v593
  %v595 = vpop.f32.mrb[0].mxu0
  %596 = vmatprep.mubr.f32.mxu0 0.0
  %597 = vmatmul.mubr.f32.gmra.mrb[0].mxu0 %v251
  %v598 = vpop.f32.mrb[0].mxu0
  %v599 = vadd.f32 %v118, %v598
  %v600 = vpop.f32.mrb[0].mxu0
  %601 = vmatprep.mubr.f32.mxu0 0.0
  %602 = vmatmul.mubr.f32.gmra.mrb[0].mxu0 %v254
  %v603 = vpop.f32.mrb[0].mxu0
  %v604 = vadd.f32 %v118, %v603
  %v605 = vpop.f32.mrb[0].mxu0
  %606 = vmatprep.mubr.f32.mxu0 0.0
  %607 = vmatmul.mubr.f32.gmra.mrb[0].mxu0 %v257
  %v608 = vpop.f32.mrb[0].mxu0
  %v609 = vadd.f32 %v118, %v608
  %v610 = vpop.f32.mrb[0].mxu0
  %611 = vmatprep.mubr.f32.mxu0 0.0
  %612 = vmatmul.mubr.f32.gmra.mrb[0].mxu0 %v260
  %v613 = vpop.f32.mrb[0].mxu0
  %v614 = vadd.f32 %v118, %v613
  %v615 = vpop.f32.mrb[0].mxu0
  %616 = vmatprep.mubr.f32.mxu0 0.0
  %617 = vmatmul.mubr.f32.gmra.mrb[0].mxu0 %v263
  %v618 = vpop.f32.mrb[0].mxu0
  %v619 = vadd.f32 %v118, %v618
  %v620 = vpop.f32.mrb[0].mxu0
  %621 = vmatprep.mubr.f32.mxu0 0.0
  %622 = vmatmul.mubr.f32.gmra.mrb[0].mxu0 %v266
  %v623 = vpop.f32.mrb[0].mxu0
  %v624 = vadd.f32 %v118, %v623
  %v625 = vpop.f32.mrb[0].mxu0
  %626 = vmatprep.mubr.f32.mxu0 0.0
  %627 = vmatmul.mubr.f32.gmra.mrb[0].mxu0 %v269
  %v628 = vpop.f32.mrb[0].mxu0
  %v629 = vadd.f32 %v118, %v628
  %v630 = vpop.f32.mrb[0].mxu0
  %631 = vmatprep.mubr.f32.mxu0 0.0
  %632 = vmatmul.mubr.f32.gmra.mrb[0].mxu0 %v272
  %v633 = vpop.f32.mrb[0].mxu0
  %v634 = vadd.f32 %v118, %v633
  %v635 = vpop.f32.mrb[0].mxu0
  %636 = vmatprep.mubr.f32.mxu0 0.0
  %637 = vmatmul.mubr.f32.gmra.mrb[0].mxu0 %v275
  %v638 = vpop.f32.mrb[0].mxu0
  %v639 = vadd.f32 %v118, %v638
  %v640 = vpop.f32.mrb[0].mxu0
  %641 = vmatprep.mubr.f32.mxu0 0.0
  %642 = vmatmul.mubr.f32.gmra.mrb[0].mxu0 %v278
  %v643 = vpop.f32.mrb[0].mxu0
  %v644 = vadd.f32 %v118, %v643
  %v645 = vpop.f32.mrb[0].mxu0
  %646 = vmatprep.mubr.f32.mxu0 0.0
  %647 = vmatmul.mubr.f32.gmra.mrb[0].mxu0 %v281
  %v648 = vpop.f32.mrb[0].mxu0
  %v649 = vadd.f32 %v118, %v648
  %v650 = vpop.f32.mrb[0].mxu0
  %651 = vmatprep.mubr.f32.mxu0 0.0
  %652 = vmatmul.mubr.f32.gmra.mrb[0].mxu0 %v284
  %v653 = vpop.f32.mrb[0].mxu0
  %v654 = vadd.f32 %v118, %v653
  %v655 = vpop.f32.mrb[0].mxu0
  %656 = vmatprep.mubr.f32.mxu0 0.0
  %657 = vmatmul.mubr.f32.gmra.mrb[0].mxu0 %v287
  %v658 = vpop.f32.mrb[0].mxu0
  %v659 = vadd.f32 %v118, %v658
  %v660 = vpop.f32.mrb[0].mxu0
  %661 = vmatprep.mubr.f32.mxu0 0.0
  %662 = vmatmul.mubr.f32.gmra.mrb[0].mxu0 %v290
  %v663 = vpop.f32.mrb[0].mxu0
  %v664 = vadd.f32 %v118, %v663
  %v665 = vpop.f32.mrb[0].mxu0
  %666 = vmatprep.mubr.f32.mxu0 0.0
  %667 = vmatmul.mubr.f32.gmra.mrb[0].mxu0 %v293
  %v668 = vpop.f32.mrb[0].mxu0
  %v669 = vadd.f32 %v118, %v668
  %v670 = vpop.f32.mrb[0].mxu0
  %671 = vmatprep.mubr.f32.mxu0 0.0
  %672 = vmatmul.mubr.f32.gmra.mrb[0].mxu0 %v296
  %v673 = vpop.f32.mrb[0].mxu0
  %v674 = vadd.f32 %v118, %v673
  %v675 = vpop.f32.mrb[0].mxu0
  %676 = vmatprep.mubr.f32.mxu0 0.0
  %677 = vmatmul.mubr.f32.gmra.mrb[0].mxu0 %v299
  %v678 = vpop.f32.mrb[0].mxu0
  %v679 = vadd.f32 %v118, %v678
  %v680 = vpop.f32.mrb[0].mxu0
  %681 = vmatprep.mubr.f32.mxu0 0.0
  %682 = vmatmul.mubr.f32.gmra.mrb[0].mxu0 %v302
  %v683 = vpop.f32.mrb[0].mxu0
  %v684 = vadd.f32 %v118, %v683
  %v685 = vpop.f32.mrb[0].mxu0
  %686 = vmatprep.mubr.f32.mxu0 0.0
  %687 = vmatmul.mubr.f32.gmra.mrb[0].mxu0 %v305
  %v688 = vpop.f32.mrb[0].mxu0
  %v689 = vadd.f32 %v118, %v688
  %v690 = vpop.f32.mrb[0].mxu0
  %691 = vmatprep.mubr.f32.mxu0 0.0
  %692 = vmatmul.mubr.f32.gmra.mrb[0].mxu0 %v308
  %v693 = vpop.f32.mrb[0].mxu0
  %v694 = vadd.f32 %v118, %v693
  %v695 = vpop.f32.mrb[0].mxu0
  %696 = vmatprep.mubr.f32.mxu0 0.0
  %697 = vmatmul.mubr.f32.gmra.mrb[0].mxu0 %v311
  %v698 = vpop.f32.mrb[0].mxu0
  %v699 = vadd.f32 %v118, %v698
  %v700 = vpop.f32.mrb[0].mxu0
  %701 = vdwg.mxu0
  %v702 = vmax.f32 %v384, 0.0
  %v703 = vmax.f32 %v389, 0.0
  %v704 = vmax.f32 %v394, 0.0
  %v705 = vmax.f32 %v399, 0.0
  %v706 = vmax.f32 %v404, 0.0
  %v707 = vmax.f32 %v409, 0.0
  %v708 = vmax.f32 %v414, 0.0
  %v709 = vmax.f32 %v419, 0.0
  %v710 = vmax.f32 %v424, 0.0
  %v711 = vmax.f32 %v429, 0.0
  %v712 = vmax.f32 %v434, 0.0
  %v713 = vmax.f32 %v439, 0.0
  %v714 = vmax.f32 %v444, 0.0
  %v715 = vmax.f32 %v449, 0.0
  %v716 = vmax.f32 %v454, 0.0
  %v717 = vmax.f32 %v459, 0.0
  %v718 = vmax.f32 %v464, 0.0
  %v719 = vmax.f32 %v469, 0.0
  %v720 = vmax.f32 %v474, 0.0
  %v721 = vmax.f32 %v479, 0.0
  %v722 = vmax.f32 %v484, 0.0
  %v723 = vmax.f32 %v489, 0.0
  %v724 = vmax.f32 %v494, 0.0
  %v725 = vmax.f32 %v499, 0.0
  %v726 = vmax.f32 %v504, 0.0
  %v727 = vmax.f32 %v509, 0.0
  %v728 = vmax.f32 %v514, 0.0
  %v729 = vmax.f32 %v519, 0.0
  %v730 = vmax.f32 %v524, 0.0
  %v731 = vmax.f32 %v529, 0.0
  %v732 = vmax.f32 %v534, 0.0
  %v733 = vmax.f32 %v539, 0.0
  %v734 = vmax.f32 %v544, 0.0
  %v735 = vmax.f32 %v549, 0.0
  %v736 = vmax.f32 %v554, 0.0
  %v737 = vmax.f32 %v559, 0.0
  %v738 = vmax.f32 %v564, 0.0
  %v739 = vmax.f32 %v569, 0.0
  %v740 = vmax.f32 %v574, 0.0
  %v741 = vmax.f32 %v579, 0.0
  %v742 = vmax.f32 %v584, 0.0
  %v743 = vmax.f32 %v589, 0.0
  %v744 = vmax.f32 %v594, 0.0
  %v745 = vmax.f32 %v599, 0.0
  %v746 = vmax.f32 %v604, 0.0
  %v747 = vmax.f32 %v609, 0.0
  %v748 = vmax.f32 %v614, 0.0
  %v749 = vmax.f32 %v619, 0.0
  %v750 = vmax.f32 %v624, 0.0
  %v751 = vmax.f32 %v629, 0.0
  %v752 = vmax.f32 %v634, 0.0
  %v753 = vmax.f32 %v639, 0.0
  %v754 = vmax.f32 %v644, 0.0
  %v755 = vmax.f32 %v649, 0.0
  %v756 = vmax.f32 %v654, 0.0
  %v757 = vmax.f32 %v659, 0.0
  %v758 = vmax.f32 %v664, 0.0
  %v759 = vmax.f32 %v669, 0.0
  %v760 = vmax.f32 %v674, 0.0
  %v761 = vmax.f32 %v679, 0.0
  %v762 = vmax.f32 %v684, 0.0
  %v763 = vmax.f32 %v689, 0.0
  %v764 = vmax.f32 %v694, 0.0
  %v765 = vmax.f32 %v699, 0.0
  %766 = vmatprep.subr.mxu0 0.0
  %767 = vmatpush1.msra.mxu0 %v702
  %768 = vmatprep.subr.mxu0 0.0
  %769 = vmatpush1.msra.mxu0 %v703
  %770 = vmatprep.subr.mxu0 0.0
  %771 = vmatpush1.msra.mxu0 %v704
  %772 = vmatprep.subr.mxu0 0.0
  %773 = vmatpush1.msra.mxu0 %v705
  %774 = vmatprep.subr.mxu0 0.0
  %775 = vmatpush1.msra.mxu0 %v706
  %776 = vmatprep.subr.mxu0 0.0
  %777 = vmatpush1.msra.mxu0 %v707
  %778 = vmatprep.subr.mxu0 0.0
  %779 = vmatpush1.msra.mxu0 %v708
  %780 = vmatprep.subr.mxu0 0.0
  %781 = vmatpush1.msra.mxu0 %v709
  %782 = vmatprep.subr.mxu0 0.0
  %783 = vmatpush1.msra.mxu0 %v710
  %784 = vmatprep.subr.mxu0 0.0
  %785 = vmatpush1.msra.mxu0 %v711
  %786 = vmatprep.subr.mxu0 0.0
  %787 = vmatpush1.msra.mxu0 %v712
  %788 = vmatprep.subr.mxu0 0.0
  %789 = vmatpush1.msra.mxu0 %v713
  %790 = vmatprep.subr.mxu0 0.0
  %791 = vmatpush1.msra.mxu0 %v714
  %792 = vmatprep.subr.mxu0 0.0
  %793 = vmatpush1.msra.mxu0 %v715
  %794 = vmatprep.subr.mxu0 0.0
  %795 = vmatpush1.msra.mxu0 %v716
  %796 = vmatprep.subr.mxu0 0.0
  %797 = vmatpush1.msra.mxu0 %v717
  %798 = vmatprep.subr.mxu0 0.0
  %799 = vmatpush1.msra.mxu0 %v718
  %800 = vmatprep.subr.mxu0 0.0
  %801 = vmatpush1.msra.mxu0 %v719
  %802 = vmatprep.subr.mxu0 0.0
  %803 = vmatpush1.msra.mxu0 %v720
  %804 = vmatprep.subr.mxu0 0.0
  %805 = vmatpush1.msra.mxu0 %v721
  %806 = vmatprep.subr.mxu0 0.0
  %807 = vmatpush1.msra.mxu0 %v722
  %808 = vmatprep.subr.mxu0 0.0
  %809 = vmatpush1.msra.mxu0 %v723
  %810 = vmatprep.subr.mxu0 0.0
  %811 = vmatpush1.msra.mxu0 %v724
  %812 = vmatprep.subr.mxu0 0.0
  %813 = vmatpush1.msra.mxu0 %v725
  %814 = vmatprep.subr.mxu0 0.0
  %815 = vmatpush1.msra.mxu0 %v726
  %816 = vmatprep.subr.mxu0 0.0
  %817 = vmatpush1.msra.mxu0 %v727
  %818 = vmatprep.subr.mxu0 0.0
  %819 = vmatpush1.msra.mxu0 %v728
  %820 = vmatprep.subr.mxu0 0.0
  %821 = vmatpush1.msra.mxu0 %v729
  %822 = vmatprep.subr.mxu0 0.0
  %823 = vmatpush1.msra.mxu0 %v730
  %824 = vmatprep.subr.mxu0 0.0
  %825 = vmatpush1.msra.mxu0 %v731
  %826 = vmatprep.subr.mxu0 0.0
  %827 = vmatpush1.msra.mxu0 %v732
  %828 = vmatprep.subr.mxu0 0.0
  %829 = vmatpush1.msra.mxu0 %v733
  %830 = vmatprep.mubr.f32.mxu0 1.0
  %831 = vmatmul.mubr.f32.gmra.mrb[0].mxu0 1.0
  %v832 = vpop.f32.mrb[0].mxu0
  %v833 = vadd.f32 0.0, %v832
  %v834 = vpop.f32.mrb[0].mxu0
  %835 = vdwg.mxu0
  %836 = vmatprep.subr.mxu0 0.0
  %837 = vmatpush1.msra.mxu0 %v734
  %838 = vmatprep.subr.mxu0 0.0
  %839 = vmatpush1.msra.mxu0 %v735
  %840 = vmatprep.subr.mxu0 0.0
  %841 = vmatpush1.msra.mxu0 %v736
  %842 = vmatprep.subr.mxu0 0.0
  %843 = vmatpush1.msra.mxu0 %v737
  %844 = vmatprep.subr.mxu0 0.0
  %845 = vmatpush1.msra.mxu0 %v738
  %846 = vmatprep.subr.mxu0 0.0
  %847 = vmatpush1.msra.mxu0 %v739
  %848 = vmatprep.subr.mxu0 0.0
  %849 = vmatpush1.msra.mxu0 %v740
  %850 = vmatprep.subr.mxu0 0.0
  %851 = vmatpush1.msra.mxu0 %v741
  %852 = vmatprep.subr.mxu0 0.0
  %853 = vmatpush1.msra.mxu0 %v742
  %854 = vmatprep.subr.mxu0 0.0
  %855 = vmatpush1.msra.mxu0 %v743
  %856 = vmatprep.subr.mxu0 0.0
  %857 = vmatpush1.msra.mxu0 %v744
  %858 = vmatprep.subr.mxu0 0.0
  %859 = vmatpush1.msra.mxu0 %v745
  %860 = vmatprep.subr.mxu0 0.0
  %861 = vmatpush1.msra.mxu0 %v746
  %862 = vmatprep.subr.mxu0 0.0
  %863 = vmatpush1.msra.mxu0 %v747
  %864 = vmatprep.subr.mxu0 0.0
  %865 = vmatpush1.msra.mxu0 %v748
  %866 = vmatprep.subr.mxu0 0.0
  %867 = vmatpush1.msra.mxu0 %v749
  %868 = vmatprep.subr.mxu0 0.0
  %869 = vmatpush1.msra.mxu0 %v750
  %870 = vmatprep.subr.mxu0 0.0
  %871 = vmatpush1.msra.mxu0 %v751
  %872 = vmatprep.subr.mxu0 0.0
  %873 = vmatpush1.msra.mxu0 %v752
  %874 = vmatprep.subr.mxu0 0.0
  %875 = vmatpush1.msra.mxu0 %v753
  %876 = vmatprep.subr.mxu0 0.0
  %877 = vmatpush1.msra.mxu0 %v754
  %878 = vmatprep.subr.mxu0 0.0
  %879 = vmatpush1.msra.mxu0 %v755
  %880 = vmatprep.subr.mxu0 0.0
  %881 = vmatpush1.msra.mxu0 %v756
  %882 = vmatprep.subr.mxu0 0.0
  %883 = vmatpush1.msra.mxu0 %v757
  %884 = vmatprep.subr.mxu0 0.0
  %885 = vmatpush1.msra.mxu0 %v758
  %886 = vmatprep.subr.mxu0 0.0
  %887 = vmatpush1.msra.mxu0 %v759
  %888 = vmatprep.subr.mxu0 0.0
  %889 = vmatpush1.msra.mxu0 %v760
  %890 = vmatprep.subr.mxu0 0.0
  %891 = vmatpush1.msra.mxu0 %v761
  %892 = vmatprep.subr.mxu0 0.0
  %893 = vmatpush1.msra.mxu0 %v762
  %894 = vmatprep.subr.mxu0 0.0
  %895 = vmatpush1.msra.mxu0 %v763
  %896 = vmatprep.subr.mxu0 0.0
  %897 = vmatpush1.msra.mxu0 %v764
  %898 = vmatprep.subr.mxu0 0.0
  %899 = vmatpush1.msra.mxu0 %v765
  %900 = vmatprep.mubr.f32.mxu0 1.0
  %901 = vmatmul.mubr.f32.gmra.mrb[0].mxu0 1.0
  %v902 = vpop.f32.mrb[0].mxu0
  %v903 = vadd.f32 %v833, %v902
  %v904 = vpop.f32.mrb[0].mxu0
  %905 = vdwg.mxu0
  %v906 = vmul.f32 %v702, %v702
  %v907 = vmul.f32 %v703, %v703
  %v908 = vmul.f32 %v704, %v704
  %v909 = vmul.f32 %v705, %v705
  %v910 = vmul.f32 %v706, %v706
  %v911 = vmul.f32 %v707, %v707
  %v912 = vmul.f32 %v708, %v708
  %v913 = vmul.f32 %v709, %v709
  %v914 = vmul.f32 %v710, %v710
  %v915 = vmul.f32 %v711, %v711
  %v916 = vmul.f32 %v712, %v712
  %v917 = vmul.f32 %v713, %v713
  %v918 = vmul.f32 %v714, %v714
  %v919 = vmul.f32 %v715, %v715
  %v920 = vmul.f32 %v716, %v716
  %v921 = vmul.f32 %v717, %v717
  %v922 = vmul.f32 %v718, %v718
  %v923 = vmul.f32 %v719, %v719
  %v924 = vmul.f32 %v720, %v720
  %v925 = vmul.f32 %v721, %v721
  %v926 = vmul.f32 %v722, %v722
  %v927 = vmul.f32 %v723, %v723
  %v928 = vmul.f32 %v724, %v724
  %v929 = vmul.f32 %v725, %v725
  %v930 = vmul.f32 %v726, %v726
  %v931 = vmul.f32 %v727, %v727
  %v932 = vmul.f32 %v728, %v728
  %v933 = vmul.f32 %v729, %v729
  %v934 = vmul.f32 %v730, %v730
  %v935 = vmul.f32 %v731, %v731
  %v936 = vmul.f32 %v732, %v732
  %v937 = vmul.f32 %v733, %v733
  %v938 = vmul.f32 %v734, %v734
  %v939 = vmul.f32 %v735, %v735
  %v940 = vmul.f32 %v736, %v736
  %v941 = vmul.f32 %v737, %v737
  %v942 = vmul.f32 %v738, %v738
  %v943 = vmul.f32 %v739, %v739
  %v944 = vmul.f32 %v740, %v740
  %v945 = vmul.f32 %v741, %v741
  %v946 = vmul.f32 %v742, %v742
  %v947 = vmul.f32 %v743, %v743
  %v948 = vmul.f32 %v744, %v744
  %v949 = vmul.f32 %v745, %v745
  %v950 = vmul.f32 %v746, %v746
  %v951 = vmul.f32 %v747, %v747
  %v952 = vmul.f32 %v748, %v748
  %v953 = vmul.f32 %v749, %v749
  %v954 = vmul.f32 %v750, %v750
  %v955 = vmul.f32 %v751, %v751
  %v956 = vmul.f32 %v752, %v752
  %v957 = vmul.f32 %v753, %v753
  %v958 = vmul.f32 %v754, %v754
  %v959 = vmul.f32 %v755, %v755
  %v960 = vmul.f32 %v756, %v756
  %v961 = vmul.f32 %v757, %v757
  %v962 = vmul.f32 %v758, %v758
  %v963 = vmul.f32 %v759, %v759
  %v964 = vmul.f32 %v760, %v760
  %v965 = vmul.f32 %v761, %v761
  %v966 = vmul.f32 %v762, %v762
  %v967 = vmul.f32 %v763, %v763
  %v968 = vmul.f32 %v764, %v764
  %v969 = vmul.f32 %v765, %v765
  %970 = vmatprep.subr.mxu0 0.0
  %971 = vmatpush1.msra.mxu0 %v906
  %972 = vmatprep.subr.mxu0 0.0
  %973 = vmatpush1.msra.mxu0 %v907
  %974 = vmatprep.subr.mxu0 0.0
  %975 = vmatpush1.msra.mxu0 %v908
  %976 = vmatprep.subr.mxu0 0.0
  %977 = vmatpush1.msra.mxu0 %v909
  %978 = vmatprep.subr.mxu0 0.0
  %979 = vmatpush1.msra.mxu0 %v910
  %980 = vmatprep.subr.mxu0 0.0
  %981 = vmatpush1.msra.mxu0 %v911
  %982 = vmatprep.subr.mxu0 0.0
  %983 = vmatpush1.msra.mxu0 %v912
  %984 = vmatprep.subr.mxu0 0.0
  %985 = vmatpush1.msra.mxu0 %v913
  %986 = vmatprep.subr.mxu0 0.0
  %987 = vmatpush1.msra.mxu0 %v914
  %988 = vmatprep.subr.mxu0 0.0
  %989 = vmatpush1.msra.mxu0 %v915
  %990 = vmatprep.subr.mxu0 0.0
  %991 = vmatpush1.msra.mxu0 %v916
  %992 = vmatprep.subr.mxu0 0.0
  %993 = vmatpush1.msra.mxu0 %v917
  %994 = vmatprep.subr.mxu0 0.0
  %995 = vmatpush1.msra.mxu0 %v918
  %996 = vmatprep.subr.mxu0 0.0
  %997 = vmatpush1.msra.mxu0 %v919
  %998 = vmatprep.subr.mxu0 0.0
  %999 = vmatpush1.msra.mxu0 %v920
  %1000 = vmatprep.subr.mxu0 0.0
  %1001 = vmatpush1.msra.mxu0 %v921
  %1002 = vmatprep.subr.mxu0 0.0
  %1003 = vmatpush1.msra.mxu0 %v922
  %1004 = vmatprep.subr.mxu0 0.0
  %1005 = vmatpush1.msra.mxu0 %v923
  %1006 = vmatprep.subr.mxu0 0.0
  %1007 = vmatpush1.msra.mxu0 %v924
  %1008 = vmatprep.subr.mxu0 0.0
  %1009 = vmatpush1.msra.mxu0 %v925
  %1010 = vmatprep.subr.mxu0 0.0
  %1011 = vmatpush1.msra.mxu0 %v926
  %1012 = vmatprep.subr.mxu0 0.0
  %1013 = vmatpush1.msra.mxu0 %v927
  %1014 = vmatprep.subr.mxu0 0.0
  %1015 = vmatpush1.msra.mxu0 %v928
  %1016 = vmatprep.subr.mxu0 0.0
  %1017 = vmatpush1.msra.mxu0 %v929
  %1018 = vmatprep.subr.mxu0 0.0
  %1019 = vmatpush1.msra.mxu0 %v930
  %1020 = vmatprep.subr.mxu0 0.0
  %1021 = vmatpush1.msra.mxu0 %v931
  %1022 = vmatprep.subr.mxu0 0.0
  %1023 = vmatpush1.msra.mxu0 %v932
  %1024 = vmatprep.subr.mxu0 0.0
  %1025 = vmatpush1.msra.mxu0 %v933
  %1026 = vmatprep.subr.mxu0 0.0
  %1027 = vmatpush1.msra.mxu0 %v934
  %1028 = vmatprep.subr.mxu0 0.0
  %1029 = vmatpush1.msra.mxu0 %v935
  %1030 = vmatprep.subr.mxu0 0.0
  %1031 = vmatpush1.msra.mxu0 %v936
  %1032 = vmatprep.subr.mxu0 0.0
  %1033 = vmatpush1.msra.mxu0 %v937
  %1034 = vmatprep.mubr.f32.mxu0 1.0
  %1035 = vmatmul.mubr.f32.gmra.mrb[0].mxu0 1.0
  %v1036 = vpop.f32.mrb[0].mxu0
  %v1037 = vadd.f32 0.0, %v1036
  %v1038 = vpop.f32.mrb[0].mxu0
  %1039 = vdwg.mxu0
  %1040 = vmatprep.subr.mxu0 0.0
  %1041 = vmatpush1.msra.mxu0 %v938
  %1042 = vmatprep.subr.mxu0 0.0
  %1043 = vmatpush1.msra.mxu0 %v939
  %1044 = vmatprep.subr.mxu0 0.0
  %1045 = vmatpush1.msra.mxu0 %v940
  %1046 = vmatprep.subr.mxu0 0.0
  %1047 = vmatpush1.msra.mxu0 %v941
  %1048 = vmatprep.subr.mxu0 0.0
  %1049 = vmatpush1.msra.mxu0 %v942
  %1050 = vmatprep.subr.mxu0 0.0
  %1051 = vmatpush1.msra.mxu0 %v943
  %1052 = vmatprep.subr.mxu0 0.0
  %1053 = vmatpush1.msra.mxu0 %v944
  %1054 = vmatprep.subr.mxu0 0.0
  %1055 = vmatpush1.msra.mxu0 %v945
  %1056 = vmatprep.subr.mxu0 0.0
  %1057 = vmatpush1.msra.mxu0 %v946
  %1058 = vmatprep.subr.mxu0 0.0
  %1059 = vmatpush1.msra.mxu0 %v947
  %1060 = vmatprep.subr.mxu0 0.0
  %1061 = vmatpush1.msra.mxu0 %v948
  %1062 = vmatprep.subr.mxu0 0.0
  %1063 = vmatpush1.msra.mxu0 %v949
  %1064 = vmatprep.subr.mxu0 0.0
  %1065 = vmatpush1.msra.mxu0 %v950
  %1066 = vmatprep.subr.mxu0 0.0
  %1067 = vmatpush1.msra.mxu0 %v951
  %1068 = vmatprep.subr.mxu0 0.0
  %1069 = vmatpush1.msra.mxu0 %v952
  %1070 = vmatprep.subr.mxu0 0.0
  %1071 = vmatpush1.msra.mxu0 %v953
  %1072 = vmatprep.subr.mxu0 0.0
  %1073 = vmatpush1.msra.mxu0 %v954
  %1074 = vmatprep.subr.mxu0 0.0
  %1075 = vmatpush1.msra.mxu0 %v955
  %1076 = vmatprep.subr.mxu0 0.0
  %1077 = vmatpush1.msra.mxu0 %v956
  %1078 = vmatprep.subr.mxu0 0.0
  %1079 = vmatpush1.msra.mxu0 %v957
  %1080 = vmatprep.subr.mxu0 0.0
  %1081 = vmatpush1.msra.mxu0 %v958
  %1082 = vmatprep.subr.mxu0 0.0
  %1083 = vmatpush1.msra.mxu0 %v959
  %1084 = vmatprep.subr.mxu0 0.0
  %1085 = vmatpush1.msra.mxu0 %v960
  %1086 = vmatprep.subr.mxu0 0.0
  %1087 = vmatpush1.msra.mxu0 %v961
  %1088 = vmatprep.subr.mxu0 0.0
  %1089 = vmatpush1.msra.mxu0 %v962
  %1090 = vmatprep.subr.mxu0 0.0
  %1091 = vmatpush1.msra.mxu0 %v963
  %1092 = vmatprep.subr.mxu0 0.0
  %1093 = vmatpush1.msra.mxu0 %v964
  %1094 = vmatprep.subr.mxu0 0.0
  %1095 = vmatpush1.msra.mxu0 %v965
  %1096 = vmatprep.subr.mxu0 0.0
  %1097 = vmatpush1.msra.mxu0 %v966
  %1098 = vmatprep.subr.mxu0 0.0
  %1099 = vmatpush1.msra.mxu0 %v967
  %1100 = vmatprep.subr.mxu0 0.0
  %1101 = vmatpush1.msra.mxu0 %v968
  %1102 = vmatprep.subr.mxu0 0.0
  %1103 = vmatpush1.msra.mxu0 %v969
  %1104 = vmatprep.mubr.f32.mxu0 1.0
  %1105 = vmatmul.mubr.f32.gmra.mrb[0].mxu0 1.0
  %v1106 = vpop.f32.mrb[0].mxu0
  %v1107 = vadd.f32 %v1037, %v1106
  %v1108 = vpop.f32.mrb[0].mxu0
  %1109 = vdwg.mxu0
  %v1110 = vld [vmem:[%s3] sm:$0x1]
  %v1111 = vadd.f32 %v1110, %v903
  %1112 = vst [vmem:[%s3] sm:$0x1] %v1111
  %v1113 = vld [vmem:[%s4] sm:$0x1]
  %v1114 = vadd.f32 %v1113, %v1107
  %1115 = vst [vmem:[%s4] sm:$0x1] %v1114
  // Predicated region
  $region18: #{sparse_conv_block.2} parent=0 // pred_check
    _
  $region19: #{sparse_conv_block.2} parent=0 // pred_check_branch
    %1117 = sbr.rel (0) target = $region21
  $region20: #{sparse_conv_block.2} parent=0 // pred_region
    _
  $region21: #{sparse_conv_block.2} parent=0 // pred_fallthru
    _
  // Predicated region
  $region22: #{sparse_conv_block.2} parent=0 // pred_check
    _
  $region23: #{sparse_conv_block.2} parent=0 // pred_check_branch
    %1119 = sbr.rel (0) target = $region25
  $region24: #{sparse_conv_block.2} parent=0 // pred_region
    _
  $region25: #{sparse_conv_block.2} parent=0 // pred_fallthru
    _
  // Predicated region
  $region26: #{sparse_conv_block.2} parent=0 // pred_check
    _
  $region27: #{sparse_conv_block.2} parent=0 // pred_check_branch
    %1121 = sbr.rel (0) target = $region29
  $region28: #{sparse_conv_block.2} parent=0 // pred_region
    _
  $region29: #{sparse_conv_block.2} parent=0 // pred_fallthru
    _
  // Predicated region
  $region30: #{sparse_conv_block.2} parent=0 // pred_check
    _
  $region31: #{sparse_conv_block.2} parent=0 // pred_check_branch
    %1123 = sbr.rel (0) target = $region33
  $region32: #{sparse_conv_block.2} parent=0 // pred_region
    _
  $region33: #{sparse_conv_block.2} parent=0 // pred_fallthru
    _

// kernel: sparse_conv_block.3
$region0: #{sparse_conv_block.3}
  #allocation0 [shape = 'u32[]', space=smem, size = 0x4, offset = 0x4, fixed_abs, tag = 'smem constant byte address 0x4 - core index']
  #allocation1 [shape = 'u32[144,128]{1,0:T(1,128)}', space=vmem, size = 0x12000, scoped, tag = 'internal scratch']
  %s0 = inlined_call_operand.vmem [shape: f32[512,36], index: 0, kind: input, shape index: {}]
  %s1 = inlined_call_operand.vmem [shape: f32[36,128], index: 1, kind: input, shape index: {}]
  %s2 = inlined_call_operand.vmem [shape: f32[1,128], index: 2, kind: input, shape index: {}]
  %s3 = inlined_call_operand.vmem [shape: f32[1,128], index: 3, kind: input, shape index: {}]
  %s4 = inlined_call_operand.vmem [shape: f32[1,128], index: 4, kind: input, shape index: {}]
  %s5 = inlined_call_operand.vmem [shape: f32[512,128], index: 5, kind: output, shape index: {}]
  %s6 = sld [smem:[#allocation0]]
  $region30: #{sparse_conv_block.3} parent=0
    _
  %s8 = ssub.s32 1, %s6
  %s9 = scalar_select 0, %s8, %s6
  // Predicated region
  $region2: #{sparse_conv_block.3} parent=0 // pred_check
    _
  $region3: #{sparse_conv_block.3} parent=0 // pred_check_branch
    %11 = sbr.rel (0) target = $region5
  $region4: #{sparse_conv_block.3} parent=0 // pred_region
    _
  $region5: #{sparse_conv_block.3} parent=0 // pred_fallthru
    _
  // Predicated region
  $region6: #{sparse_conv_block.3} parent=0 // pred_check
    _
  $region7: #{sparse_conv_block.3} parent=0 // pred_check_branch
    %13 = sbr.rel (0) target = $region9
  $region8: #{sparse_conv_block.3} parent=0 // pred_region
    _
  $region9: #{sparse_conv_block.3} parent=0 // pred_fallthru
    _
  // Predicated region
  $region10: #{sparse_conv_block.3} parent=0 // pred_check
    _
  $region11: #{sparse_conv_block.3} parent=0 // pred_check_branch
    %15 = sbr.rel (0) target = $region13
  $region12: #{sparse_conv_block.3} parent=0 // pred_region
    _
  $region13: #{sparse_conv_block.3} parent=0 // pred_fallthru
    _
  // Predicated region
  $region14: #{sparse_conv_block.3} parent=0 // pred_check
    _
  $region15: #{sparse_conv_block.3} parent=0 // pred_check_branch
    %17 = sbr.rel (0) target = $region17
  $region16: #{sparse_conv_block.3} parent=0 // pred_region
    _
  $region17: #{sparse_conv_block.3} parent=0 // pred_fallthru
    _
  // Predicated region
  $region18: #{sparse_conv_block.3} parent=0 // pred_check
    _
  $region19: #{sparse_conv_block.3} parent=0 // pred_check_branch
    %19 = sbr.rel (0) target = $region21
  $region20: #{sparse_conv_block.3} parent=0 // pred_region
    _
  $region21: #{sparse_conv_block.3} parent=0 // pred_fallthru
    _
  %v20 = vld [vmem:[%s0] sm:$0xff]
  %v21 = vld [vmem:[%s0 + $0x8] sm:$0xff]
  %v22 = vld [vmem:[%s0 + $0x10] sm:$0xff]
  %v23 = vld [vmem:[%s0 + $0x18] sm:$0xff]
  %v24 = vld [vmem:[%s0 + $0x20] sm:$0xff]
  %v25 = vld [vmem:[%s0 + $0x28] sm:$0xff]
  %v26 = vld [vmem:[%s0 + $0x30] sm:$0xff]
  %v27 = vld [vmem:[%s0 + $0x38] sm:$0xff]
  %v28 = vld [vmem:[%s0 + $0x40] sm:$0xff]
  %v29 = vld [vmem:[%s0 + $0x48] sm:$0xff]
  %v30 = vld [vmem:[%s0 + $0x50] sm:$0xff]
  %v31 = vld [vmem:[%s0 + $0x58] sm:$0xff]
  %v32 = vld [vmem:[%s0 + $0x60] sm:$0xff]
  %v33 = vld [vmem:[%s0 + $0x68] sm:$0xff]
  %v34 = vld [vmem:[%s0 + $0x70] sm:$0xff]
  %v35 = vld [vmem:[%s0 + $0x78] sm:$0xff]
  %v36 = vld [vmem:[%s0 + $0x80] sm:$0xff]
  %v37 = vld [vmem:[%s0 + $0x88] sm:$0xff]
  %v38 = vld [vmem:[%s0 + $0x90] sm:$0xff]
  %v39 = vld [vmem:[%s0 + $0x98] sm:$0xff]
  %v40 = vld [vmem:[%s0 + $0xa0] sm:$0xff]
  %v41 = vld [vmem:[%s0 + $0xa8] sm:$0xff]
  %v42 = vld [vmem:[%s0 + $0xb0] sm:$0xff]
  %v43 = vld [vmem:[%s0 + $0xb8] sm:$0xff]
  %v44 = vld [vmem:[%s0 + $0xc0] sm:$0xff]
  %v45 = vld [vmem:[%s0 + $0xc8] sm:$0xff]
  %v46 = vld [vmem:[%s0 + $0xd0] sm:$0xff]
  %v47 = vld [vmem:[%s0 + $0xd8] sm:$0xff]
  %v48 = vld [vmem:[%s0 + $0xe0] sm:$0xff]
  %v49 = vld [vmem:[%s0 + $0xe8] sm:$0xff]
  %v50 = vld [vmem:[%s0 + $0xf0] sm:$0xff]
  %v51 = vld [vmem:[%s0 + $0xf8] sm:$0xff]
  %v52 = vld [vmem:[%s0 + $0x100] sm:$0xff]
  %v53 = vld [vmem:[%s0 + $0x108] sm:$0xff]
  %v54 = vld [vmem:[%s0 + $0x110] sm:$0xff]
  %v55 = vld [vmem:[%s0 + $0x118] sm:$0xff]
  %v56 = vld [vmem:[%s0 + $0x120] sm:$0xff]
  %v57 = vld [vmem:[%s0 + $0x128] sm:$0xff]
  %v58 = vld [vmem:[%s0 + $0x130] sm:$0xff]
  %v59 = vld [vmem:[%s0 + $0x138] sm:$0xff]
  %v60 = vld [vmem:[%s0 + $0x140] sm:$0xff]
  %v61 = vld [vmem:[%s0 + $0x148] sm:$0xff]
  %v62 = vld [vmem:[%s0 + $0x150] sm:$0xff]
  %v63 = vld [vmem:[%s0 + $0x158] sm:$0xff]
  %v64 = vld [vmem:[%s0 + $0x160] sm:$0xff]
  %v65 = vld [vmem:[%s0 + $0x168] sm:$0xff]
  %v66 = vld [vmem:[%s0 + $0x170] sm:$0xff]
  %v67 = vld [vmem:[%s0 + $0x178] sm:$0xff]
  %v68 = vld [vmem:[%s0 + $0x180] sm:$0xff]
  %v69 = vld [vmem:[%s0 + $0x188] sm:$0xff]
  %v70 = vld [vmem:[%s0 + $0x190] sm:$0xff]
  %v71 = vld [vmem:[%s0 + $0x198] sm:$0xff]
  %v72 = vld [vmem:[%s0 + $0x1a0] sm:$0xff]
  %v73 = vld [vmem:[%s0 + $0x1a8] sm:$0xff]
  %v74 = vld [vmem:[%s0 + $0x1b0] sm:$0xff]
  %v75 = vld [vmem:[%s0 + $0x1b8] sm:$0xff]
  %v76 = vld [vmem:[%s0 + $0x1c0] sm:$0xff]
  %v77 = vld [vmem:[%s0 + $0x1c8] sm:$0xff]
  %v78 = vld [vmem:[%s0 + $0x1d0] sm:$0xff]
  %v79 = vld [vmem:[%s0 + $0x1d8] sm:$0xff]
  %v80 = vld [vmem:[%s0 + $0x1e0] sm:$0xff]
  %v81 = vld [vmem:[%s0 + $0x1e8] sm:$0xff]
  %v82 = vld [vmem:[%s0 + $0x1f0] sm:$0xff]
  %v83 = vld [vmem:[%s0 + $0x1f8] sm:$0xff]
  %v84 = vld [vmem:[%s1] sm:$0xff]
  %v85 = vld [vmem:[%s1 + $0x8] sm:$0xff]
  %v86 = vld [vmem:[%s1 + $0x10] sm:$0xff]
  %v87 = vld [vmem:[%s1 + $0x18] sm:$0xff]
  %v88 = vld [vmem:[%s1 + $0x20] sm:$0xf]
  %v89 = vld [vmem:[%s2] sm:$0x1]
  %v91 = vlaneseq
  %v92 = vshrl.u32 %v91, 7
  %v93 = vsub.s32 0, %v92
  %v94 = vrot.slane %v89, %v93
  %vm96 = vcmask 293888
  %v98 = vsel %vm96, %v20, 0
  %v101 = vsel %vm96, %v21, 0
  %v104 = vsel %vm96, %v22, 0
  %v107 = vsel %vm96, %v23, 0
  %v110 = vsel %vm96, %v24, 0
  %v113 = vsel %vm96, %v25, 0
  %v116 = vsel %vm96, %v26, 0
  %v119 = vsel %vm96, %v27, 0
  %v122 = vsel %vm96, %v28, 0
  %v125 = vsel %vm96, %v29, 0
  %v128 = vsel %vm96, %v30, 0
  %v131 = vsel %vm96, %v31, 0
  %v134 = vsel %vm96, %v32, 0
  %v137 = vsel %vm96, %v33, 0
  %v140 = vsel %vm96, %v34, 0
  %v143 = vsel %vm96, %v35, 0
  %v146 = vsel %vm96, %v36, 0
  %v149 = vsel %vm96, %v37, 0
  %v152 = vsel %vm96, %v38, 0
  %v155 = vsel %vm96, %v39, 0
  %v158 = vsel %vm96, %v40, 0
  %v161 = vsel %vm96, %v41, 0
  %v164 = vsel %vm96, %v42, 0
  %v167 = vsel %vm96, %v43, 0
  %v170 = vsel %vm96, %v44, 0
  %v173 = vsel %vm96, %v45, 0
  %v176 = vsel %vm96, %v46, 0
  %v179 = vsel %vm96, %v47, 0
  %v182 = vsel %vm96, %v48, 0
  %v185 = vsel %vm96, %v49, 0
  %v188 = vsel %vm96, %v50, 0
  %v191 = vsel %vm96, %v51, 0
  %v194 = vsel %vm96, %v52, 0
  %v197 = vsel %vm96, %v53, 0
  %v200 = vsel %vm96, %v54, 0
  %v203 = vsel %vm96, %v55, 0
  %v206 = vsel %vm96, %v56, 0
  %v209 = vsel %vm96, %v57, 0
  %v212 = vsel %vm96, %v58, 0
  %v215 = vsel %vm96, %v59, 0
  %v218 = vsel %vm96, %v60, 0
  %v221 = vsel %vm96, %v61, 0
  %v224 = vsel %vm96, %v62, 0
  %v227 = vsel %vm96, %v63, 0
  %v230 = vsel %vm96, %v64, 0
  %v233 = vsel %vm96, %v65, 0
  %v236 = vsel %vm96, %v66, 0
  %v239 = vsel %vm96, %v67, 0
  %v242 = vsel %vm96, %v68, 0
  %v245 = vsel %vm96, %v69, 0
  %v248 = vsel %vm96, %v70, 0
  %v251 = vsel %vm96, %v71, 0
  %v254 = vsel %vm96, %v72, 0
  %v257 = vsel %vm96, %v73, 0
  %v260 = vsel %vm96, %v74, 0
  %v263 = vsel %vm96, %v75, 0
  %v266 = vsel %vm96, %v76, 0
  %v269 = vsel %vm96, %v77, 0
  %v272 = vsel %vm96, %v78, 0
  %v275 = vsel %vm96, %v79, 0
  %v278 = vsel %vm96, %v80, 0
  %v281 = vsel %vm96, %v81, 0
  %v284 = vsel %vm96, %v82, 0
  %v287 = vsel %vm96, %v83, 0
  %vm289 = vcmask 1043456
  %v291 = vsel %vm289, %v88, 0
  %293 = vmatprep.subr.mxu0 0.0
  %294 = vmatpush1.msra.mxu0 %v84
  %295 = vmatprep.subr.mxu0 0.0
  %296 = vmatpush1.msra.mxu0 %v85
  %297 = vmatprep.subr.mxu0 0.0
  %298 = vmatpush1.msra.mxu0 %v86
  %299 = vmatprep.subr.mxu0 0.0
  %300 = vmatpush1.msra.mxu0 %v87
  %301 = vmatprep.subr.mxu0 0.0
  %302 = vmatpush1.msra.mxu0 %v291
  %303 = vmatprep.subr.mxu0 0.0
  %304 = vmatpush1.msra.mxu0 0.0
  %305 = vmatprep.subr.mxu0 0.0
  %306 = vmatpush1.msra.mxu0 0.0
  %307 = vmatprep.subr.mxu0 0.0
  %308 = vmatpush1.msra.mxu0 0.0
  %309 = vmatprep.subr.mxu0 0.0
  %310 = vmatpush1.msra.mxu0 0.0
  %311 = vmatprep.subr.mxu0 0.0
  %312 = vmatpush1.msra.mxu0 0.0
  %313 = vmatprep.subr.mxu0 0.0
  %314 = vmatpush1.msra.mxu0 0.0
  %315 = vmatprep.subr.mxu0 0.0
  %316 = vmatpush1.msra.mxu0 0.0
  %317 = vmatprep.subr.mxu0 0.0
  %318 = vmatpush1.msra.mxu0 0.0
  %319 = vmatprep.subr.mxu0 0.0
  %320 = vmatpush1.msra.mxu0 0.0
  %321 = vmatprep.subr.mxu0 0.0
  %322 = vmatpush1.msra.mxu0 0.0
  %323 = vmatprep.subr.mxu0 0.0
  %324 = vmatpush1.msra.mxu0 0.0
  %325 = vmatprep.subr.mxu0 0.0
  %326 = vmatpush1.msra.mxu0 0.0
  %327 = vmatprep.subr.mxu0 0.0
  %328 = vmatpush1.msra.mxu0 0.0
  %329 = vmatprep.subr.mxu0 0.0
  %330 = vmatpush1.msra.mxu0 0.0
  %331 = vmatprep.subr.mxu0 0.0
  %332 = vmatpush1.msra.mxu0 0.0
  %333 = vmatprep.subr.mxu0 0.0
  %334 = vmatpush1.msra.mxu0 0.0
  %335 = vmatprep.subr.mxu0 0.0
  %336 = vmatpush1.msra.mxu0 0.0
  %337 = vmatprep.subr.mxu0 0.0
  %338 = vmatpush1.msra.mxu0 0.0
  %339 = vmatprep.subr.mxu0 0.0
  %340 = vmatpush1.msra.mxu0 0.0
  %341 = vmatprep.subr.mxu0 0.0
  %342 = vmatpush1.msra.mxu0 0.0
  %343 = vmatprep.subr.mxu0 0.0
  %344 = vmatpush1.msra.mxu0 0.0
  %345 = vmatprep.subr.mxu0 0.0
  %346 = vmatpush1.msra.mxu0 0.0
  %347 = vmatprep.subr.mxu0 0.0
  %348 = vmatpush1.msra.mxu0 0.0
  %349 = vmatprep.subr.mxu0 0.0
  %350 = vmatpush1.msra.mxu0 0.0
  %351 = vmatprep.subr.mxu0 0.0
  %352 = vmatpush1.msra.mxu0 0.0
  %353 = vmatprep.subr.mxu0 0.0
  %354 = vmatpush1.msra.mxu0 0.0
  %355 = vmatprep.subr.mxu0 0.0
  %356 = vmatpush1.msra.mxu0 0.0
  %357 = vmatprep.mubr.f32.mxu0 0.0
  %358 = vmatmul.mubr.f32.gmra.mrb[0].mxu0 %v98
  %v359 = vpop.f32.mrb[0].mxu0
  %v360 = vadd.f32 %v94, %v359
  %v361 = vpop.f32.mrb[0].mxu0
  %362 = vmatprep.mubr.f32.mxu0 0.0
  %363 = vmatmul.mubr.f32.gmra.mrb[0].mxu0 %v101
  %v364 = vpop.f32.mrb[0].mxu0
  %v365 = vadd.f32 %v94, %v364
  %v366 = vpop.f32.mrb[0].mxu0
  %367 = vmatprep.mubr.f32.mxu0 0.0
  %368 = vmatmul.mubr.f32.gmra.mrb[0].mxu0 %v104
  %v369 = vpop.f32.mrb[0].mxu0
  %v370 = vadd.f32 %v94, %v369
  %v371 = vpop.f32.mrb[0].mxu0
  %372 = vmatprep.mubr.f32.mxu0 0.0
  %373 = vmatmul.mubr.f32.gmra.mrb[0].mxu0 %v107
  %v374 = vpop.f32.mrb[0].mxu0
  %v375 = vadd.f32 %v94, %v374
  %v376 = vpop.f32.mrb[0].mxu0
  %377 = vmatprep.mubr.f32.mxu0 0.0
  %378 = vmatmul.mubr.f32.gmra.mrb[0].mxu0 %v110
  %v379 = vpop.f32.mrb[0].mxu0
  %v380 = vadd.f32 %v94, %v379
  %v381 = vpop.f32.mrb[0].mxu0
  %382 = vmatprep.mubr.f32.mxu0 0.0
  %383 = vmatmul.mubr.f32.gmra.mrb[0].mxu0 %v113
  %v384 = vpop.f32.mrb[0].mxu0
  %v385 = vadd.f32 %v94, %v384
  %v386 = vpop.f32.mrb[0].mxu0
  %387 = vmatprep.mubr.f32.mxu0 0.0
  %388 = vmatmul.mubr.f32.gmra.mrb[0].mxu0 %v116
  %v389 = vpop.f32.mrb[0].mxu0
  %v390 = vadd.f32 %v94, %v389
  %v391 = vpop.f32.mrb[0].mxu0
  %392 = vmatprep.mubr.f32.mxu0 0.0
  %393 = vmatmul.mubr.f32.gmra.mrb[0].mxu0 %v119
  %v394 = vpop.f32.mrb[0].mxu0
  %v395 = vadd.f32 %v94, %v394
  %v396 = vpop.f32.mrb[0].mxu0
  %397 = vmatprep.mubr.f32.mxu0 0.0
  %398 = vmatmul.mubr.f32.gmra.mrb[0].mxu0 %v122
  %v399 = vpop.f32.mrb[0].mxu0
  %v400 = vadd.f32 %v94, %v399
  %v401 = vpop.f32.mrb[0].mxu0
  %402 = vmatprep.mubr.f32.mxu0 0.0
  %403 = vmatmul.mubr.f32.gmra.mrb[0].mxu0 %v125
  %v404 = vpop.f32.mrb[0].mxu0
  %v405 = vadd.f32 %v94, %v404
  %v406 = vpop.f32.mrb[0].mxu0
  %407 = vmatprep.mubr.f32.mxu0 0.0
  %408 = vmatmul.mubr.f32.gmra.mrb[0].mxu0 %v128
  %v409 = vpop.f32.mrb[0].mxu0
  %v410 = vadd.f32 %v94, %v409
  %v411 = vpop.f32.mrb[0].mxu0
  %412 = vmatprep.mubr.f32.mxu0 0.0
  %413 = vmatmul.mubr.f32.gmra.mrb[0].mxu0 %v131
  %v414 = vpop.f32.mrb[0].mxu0
  %v415 = vadd.f32 %v94, %v414
  %v416 = vpop.f32.mrb[0].mxu0
  %417 = vmatprep.mubr.f32.mxu0 0.0
  %418 = vmatmul.mubr.f32.gmra.mrb[0].mxu0 %v134
  %v419 = vpop.f32.mrb[0].mxu0
  %v420 = vadd.f32 %v94, %v419
  %v421 = vpop.f32.mrb[0].mxu0
  %422 = vmatprep.mubr.f32.mxu0 0.0
  %423 = vmatmul.mubr.f32.gmra.mrb[0].mxu0 %v137
  %v424 = vpop.f32.mrb[0].mxu0
  %v425 = vadd.f32 %v94, %v424
  %v426 = vpop.f32.mrb[0].mxu0
  %427 = vmatprep.mubr.f32.mxu0 0.0
  %428 = vmatmul.mubr.f32.gmra.mrb[0].mxu0 %v140
  %v429 = vpop.f32.mrb[0].mxu0
  %v430 = vadd.f32 %v94, %v429
  %v431 = vpop.f32.mrb[0].mxu0
  %432 = vmatprep.mubr.f32.mxu0 0.0
  %433 = vmatmul.mubr.f32.gmra.mrb[0].mxu0 %v143
  %v434 = vpop.f32.mrb[0].mxu0
  %v435 = vadd.f32 %v94, %v434
  %v436 = vpop.f32.mrb[0].mxu0
  %437 = vmatprep.mubr.f32.mxu0 0.0
  %438 = vmatmul.mubr.f32.gmra.mrb[0].mxu0 %v146
  %v439 = vpop.f32.mrb[0].mxu0
  %v440 = vadd.f32 %v94, %v439
  %v441 = vpop.f32.mrb[0].mxu0
  %442 = vmatprep.mubr.f32.mxu0 0.0
  %443 = vmatmul.mubr.f32.gmra.mrb[0].mxu0 %v149
  %v444 = vpop.f32.mrb[0].mxu0
  %v445 = vadd.f32 %v94, %v444
  %v446 = vpop.f32.mrb[0].mxu0
  %447 = vmatprep.mubr.f32.mxu0 0.0
  %448 = vmatmul.mubr.f32.gmra.mrb[0].mxu0 %v152
  %v449 = vpop.f32.mrb[0].mxu0
  %v450 = vadd.f32 %v94, %v449
  %v451 = vpop.f32.mrb[0].mxu0
  %452 = vmatprep.mubr.f32.mxu0 0.0
  %453 = vmatmul.mubr.f32.gmra.mrb[0].mxu0 %v155
  %v454 = vpop.f32.mrb[0].mxu0
  %v455 = vadd.f32 %v94, %v454
  %v456 = vpop.f32.mrb[0].mxu0
  %457 = vmatprep.mubr.f32.mxu0 0.0
  %458 = vmatmul.mubr.f32.gmra.mrb[0].mxu0 %v158
  %v459 = vpop.f32.mrb[0].mxu0
  %v460 = vadd.f32 %v94, %v459
  %v461 = vpop.f32.mrb[0].mxu0
  %462 = vmatprep.mubr.f32.mxu0 0.0
  %463 = vmatmul.mubr.f32.gmra.mrb[0].mxu0 %v161
  %v464 = vpop.f32.mrb[0].mxu0
  %v465 = vadd.f32 %v94, %v464
  %v466 = vpop.f32.mrb[0].mxu0
  %467 = vmatprep.mubr.f32.mxu0 0.0
  %468 = vmatmul.mubr.f32.gmra.mrb[0].mxu0 %v164
  %v469 = vpop.f32.mrb[0].mxu0
  %v470 = vadd.f32 %v94, %v469
  %v471 = vpop.f32.mrb[0].mxu0
  %472 = vmatprep.mubr.f32.mxu0 0.0
  %473 = vmatmul.mubr.f32.gmra.mrb[0].mxu0 %v167
  %v474 = vpop.f32.mrb[0].mxu0
  %v475 = vadd.f32 %v94, %v474
  %v476 = vpop.f32.mrb[0].mxu0
  %477 = vmatprep.mubr.f32.mxu0 0.0
  %478 = vmatmul.mubr.f32.gmra.mrb[0].mxu0 %v170
  %v479 = vpop.f32.mrb[0].mxu0
  %v480 = vadd.f32 %v94, %v479
  %v481 = vpop.f32.mrb[0].mxu0
  %482 = vmatprep.mubr.f32.mxu0 0.0
  %483 = vmatmul.mubr.f32.gmra.mrb[0].mxu0 %v173
  %v484 = vpop.f32.mrb[0].mxu0
  %v485 = vadd.f32 %v94, %v484
  %v486 = vpop.f32.mrb[0].mxu0
  %487 = vmatprep.mubr.f32.mxu0 0.0
  %488 = vmatmul.mubr.f32.gmra.mrb[0].mxu0 %v176
  %v489 = vpop.f32.mrb[0].mxu0
  %v490 = vadd.f32 %v94, %v489
  %v491 = vpop.f32.mrb[0].mxu0
  %492 = vmatprep.mubr.f32.mxu0 0.0
  %493 = vmatmul.mubr.f32.gmra.mrb[0].mxu0 %v179
  %v494 = vpop.f32.mrb[0].mxu0
  %v495 = vadd.f32 %v94, %v494
  %v496 = vpop.f32.mrb[0].mxu0
  %497 = vmatprep.mubr.f32.mxu0 0.0
  %498 = vmatmul.mubr.f32.gmra.mrb[0].mxu0 %v182
  %v499 = vpop.f32.mrb[0].mxu0
  %v500 = vadd.f32 %v94, %v499
  %v501 = vpop.f32.mrb[0].mxu0
  %502 = vmatprep.mubr.f32.mxu0 0.0
  %503 = vmatmul.mubr.f32.gmra.mrb[0].mxu0 %v185
  %v504 = vpop.f32.mrb[0].mxu0
  %v505 = vadd.f32 %v94, %v504
  %v506 = vpop.f32.mrb[0].mxu0
  %507 = vmatprep.mubr.f32.mxu0 0.0
  %508 = vmatmul.mubr.f32.gmra.mrb[0].mxu0 %v188
  %v509 = vpop.f32.mrb[0].mxu0
  %v510 = vadd.f32 %v94, %v509
  %v511 = vpop.f32.mrb[0].mxu0
  %512 = vmatprep.mubr.f32.mxu0 0.0
  %513 = vmatmul.mubr.f32.gmra.mrb[0].mxu0 %v191
  %v514 = vpop.f32.mrb[0].mxu0
  %v515 = vadd.f32 %v94, %v514
  %v516 = vpop.f32.mrb[0].mxu0
  %517 = vmatprep.mubr.f32.mxu0 0.0
  %518 = vmatmul.mubr.f32.gmra.mrb[0].mxu0 %v194
  %v519 = vpop.f32.mrb[0].mxu0
  %v520 = vadd.f32 %v94, %v519
  %v521 = vpop.f32.mrb[0].mxu0
  %522 = vmatprep.mubr.f32.mxu0 0.0
  %523 = vmatmul.mubr.f32.gmra.mrb[0].mxu0 %v197
  %v524 = vpop.f32.mrb[0].mxu0
  %v525 = vadd.f32 %v94, %v524
  %v526 = vpop.f32.mrb[0].mxu0
  %527 = vmatprep.mubr.f32.mxu0 0.0
  %528 = vmatmul.mubr.f32.gmra.mrb[0].mxu0 %v200
  %v529 = vpop.f32.mrb[0].mxu0
  %v530 = vadd.f32 %v94, %v529
  %v531 = vpop.f32.mrb[0].mxu0
  %532 = vmatprep.mubr.f32.mxu0 0.0
  %533 = vmatmul.mubr.f32.gmra.mrb[0].mxu0 %v203
  %v534 = vpop.f32.mrb[0].mxu0
  %v535 = vadd.f32 %v94, %v534
  %v536 = vpop.f32.mrb[0].mxu0
  %537 = vmatprep.mubr.f32.mxu0 0.0
  %538 = vmatmul.mubr.f32.gmra.mrb[0].mxu0 %v206
  %v539 = vpop.f32.mrb[0].mxu0
  %v540 = vadd.f32 %v94, %v539
  %v541 = vpop.f32.mrb[0].mxu0
  %542 = vmatprep.mubr.f32.mxu0 0.0
  %543 = vmatmul.mubr.f32.gmra.mrb[0].mxu0 %v209
  %v544 = vpop.f32.mrb[0].mxu0
  %v545 = vadd.f32 %v94, %v544
  %v546 = vpop.f32.mrb[0].mxu0
  %547 = vmatprep.mubr.f32.mxu0 0.0
  %548 = vmatmul.mubr.f32.gmra.mrb[0].mxu0 %v212
  %v549 = vpop.f32.mrb[0].mxu0
  %v550 = vadd.f32 %v94, %v549
  %v551 = vpop.f32.mrb[0].mxu0
  %552 = vmatprep.mubr.f32.mxu0 0.0
  %553 = vmatmul.mubr.f32.gmra.mrb[0].mxu0 %v215
  %v554 = vpop.f32.mrb[0].mxu0
  %v555 = vadd.f32 %v94, %v554
  %v556 = vpop.f32.mrb[0].mxu0
  %557 = vmatprep.mubr.f32.mxu0 0.0
  %558 = vmatmul.mubr.f32.gmra.mrb[0].mxu0 %v218
  %v559 = vpop.f32.mrb[0].mxu0
  %v560 = vadd.f32 %v94, %v559
  %v561 = vpop.f32.mrb[0].mxu0
  %562 = vmatprep.mubr.f32.mxu0 0.0
  %563 = vmatmul.mubr.f32.gmra.mrb[0].mxu0 %v221
  %v564 = vpop.f32.mrb[0].mxu0
  %v565 = vadd.f32 %v94, %v564
  %v566 = vpop.f32.mrb[0].mxu0
  %567 = vmatprep.mubr.f32.mxu0 0.0
  %568 = vmatmul.mubr.f32.gmra.mrb[0].mxu0 %v224
  %v569 = vpop.f32.mrb[0].mxu0
  %v570 = vadd.f32 %v94, %v569
  %v571 = vpop.f32.mrb[0].mxu0
  %572 = vmatprep.mubr.f32.mxu0 0.0
  %573 = vmatmul.mubr.f32.gmra.mrb[0].mxu0 %v227
  %v574 = vpop.f32.mrb[0].mxu0
  %v575 = vadd.f32 %v94, %v574
  %v576 = vpop.f32.mrb[0].mxu0
  %577 = vmatprep.mubr.f32.mxu0 0.0
  %578 = vmatmul.mubr.f32.gmra.mrb[0].mxu0 %v230
  %v579 = vpop.f32.mrb[0].mxu0
  %v580 = vadd.f32 %v94, %v579
  %v581 = vpop.f32.mrb[0].mxu0
  %582 = vmatprep.mubr.f32.mxu0 0.0
  %583 = vmatmul.mubr.f32.gmra.mrb[0].mxu0 %v233
  %v584 = vpop.f32.mrb[0].mxu0
  %v585 = vadd.f32 %v94, %v584
  %v586 = vpop.f32.mrb[0].mxu0
  %587 = vmatprep.mubr.f32.mxu0 0.0
  %588 = vmatmul.mubr.f32.gmra.mrb[0].mxu0 %v236
  %v589 = vpop.f32.mrb[0].mxu0
  %v590 = vadd.f32 %v94, %v589
  %v591 = vpop.f32.mrb[0].mxu0
  %592 = vmatprep.mubr.f32.mxu0 0.0
  %593 = vmatmul.mubr.f32.gmra.mrb[0].mxu0 %v239
  %v594 = vpop.f32.mrb[0].mxu0
  %v595 = vadd.f32 %v94, %v594
  %v596 = vpop.f32.mrb[0].mxu0
  %597 = vmatprep.mubr.f32.mxu0 0.0
  %598 = vmatmul.mubr.f32.gmra.mrb[0].mxu0 %v242
  %v599 = vpop.f32.mrb[0].mxu0
  %v600 = vadd.f32 %v94, %v599
  %v601 = vpop.f32.mrb[0].mxu0
  %602 = vmatprep.mubr.f32.mxu0 0.0
  %603 = vmatmul.mubr.f32.gmra.mrb[0].mxu0 %v245
  %v604 = vpop.f32.mrb[0].mxu0
  %v605 = vadd.f32 %v94, %v604
  %v606 = vpop.f32.mrb[0].mxu0
  %607 = vmatprep.mubr.f32.mxu0 0.0
  %608 = vmatmul.mubr.f32.gmra.mrb[0].mxu0 %v248
  %v609 = vpop.f32.mrb[0].mxu0
  %v610 = vadd.f32 %v94, %v609
  %v611 = vpop.f32.mrb[0].mxu0
  %612 = vmatprep.mubr.f32.mxu0 0.0
  %613 = vmatmul.mubr.f32.gmra.mrb[0].mxu0 %v251
  %v614 = vpop.f32.mrb[0].mxu0
  %v615 = vadd.f32 %v94, %v614
  %v616 = vpop.f32.mrb[0].mxu0
  %617 = vmatprep.mubr.f32.mxu0 0.0
  %618 = vmatmul.mubr.f32.gmra.mrb[0].mxu0 %v254
  %v619 = vpop.f32.mrb[0].mxu0
  %v620 = vadd.f32 %v94, %v619
  %v621 = vpop.f32.mrb[0].mxu0
  %622 = vmatprep.mubr.f32.mxu0 0.0
  %623 = vmatmul.mubr.f32.gmra.mrb[0].mxu0 %v257
  %v624 = vpop.f32.mrb[0].mxu0
  %v625 = vadd.f32 %v94, %v624
  %v626 = vpop.f32.mrb[0].mxu0
  %627 = vmatprep.mubr.f32.mxu0 0.0
  %628 = vmatmul.mubr.f32.gmra.mrb[0].mxu0 %v260
  %v629 = vpop.f32.mrb[0].mxu0
  %v630 = vadd.f32 %v94, %v629
  %v631 = vpop.f32.mrb[0].mxu0
  %632 = vmatprep.mubr.f32.mxu0 0.0
  %633 = vmatmul.mubr.f32.gmra.mrb[0].mxu0 %v263
  %v634 = vpop.f32.mrb[0].mxu0
  %v635 = vadd.f32 %v94, %v634
  %v636 = vpop.f32.mrb[0].mxu0
  %637 = vmatprep.mubr.f32.mxu0 0.0
  %638 = vmatmul.mubr.f32.gmra.mrb[0].mxu0 %v266
  %v639 = vpop.f32.mrb[0].mxu0
  %v640 = vadd.f32 %v94, %v639
  %v641 = vpop.f32.mrb[0].mxu0
  %642 = vmatprep.mubr.f32.mxu0 0.0
  %643 = vmatmul.mubr.f32.gmra.mrb[0].mxu0 %v269
  %v644 = vpop.f32.mrb[0].mxu0
  %v645 = vadd.f32 %v94, %v644
  %v646 = vpop.f32.mrb[0].mxu0
  %647 = vmatprep.mubr.f32.mxu0 0.0
  %648 = vmatmul.mubr.f32.gmra.mrb[0].mxu0 %v272
  %v649 = vpop.f32.mrb[0].mxu0
  %v650 = vadd.f32 %v94, %v649
  %v651 = vpop.f32.mrb[0].mxu0
  %652 = vmatprep.mubr.f32.mxu0 0.0
  %653 = vmatmul.mubr.f32.gmra.mrb[0].mxu0 %v275
  %v654 = vpop.f32.mrb[0].mxu0
  %v655 = vadd.f32 %v94, %v654
  %v656 = vpop.f32.mrb[0].mxu0
  %657 = vmatprep.mubr.f32.mxu0 0.0
  %658 = vmatmul.mubr.f32.gmra.mrb[0].mxu0 %v278
  %v659 = vpop.f32.mrb[0].mxu0
  %v660 = vadd.f32 %v94, %v659
  %v661 = vpop.f32.mrb[0].mxu0
  %662 = vmatprep.mubr.f32.mxu0 0.0
  %663 = vmatmul.mubr.f32.gmra.mrb[0].mxu0 %v281
  %v664 = vpop.f32.mrb[0].mxu0
  %v665 = vadd.f32 %v94, %v664
  %v666 = vpop.f32.mrb[0].mxu0
  %667 = vmatprep.mubr.f32.mxu0 0.0
  %668 = vmatmul.mubr.f32.gmra.mrb[0].mxu0 %v284
  %v669 = vpop.f32.mrb[0].mxu0
  %v670 = vadd.f32 %v94, %v669
  %v671 = vpop.f32.mrb[0].mxu0
  %672 = vmatprep.mubr.f32.mxu0 0.0
  %673 = vmatmul.mubr.f32.gmra.mrb[0].mxu0 %v287
  %v674 = vpop.f32.mrb[0].mxu0
  %v675 = vadd.f32 %v94, %v674
  %v676 = vpop.f32.mrb[0].mxu0
  %677 = vdwg.mxu0
  %v678 = vmax.f32 %v360, 0.0
  %v679 = vmax.f32 %v365, 0.0
  %v680 = vmax.f32 %v370, 0.0
  %v681 = vmax.f32 %v375, 0.0
  %v682 = vmax.f32 %v380, 0.0
  %v683 = vmax.f32 %v385, 0.0
  %v684 = vmax.f32 %v390, 0.0
  %v685 = vmax.f32 %v395, 0.0
  %v686 = vmax.f32 %v400, 0.0
  %v687 = vmax.f32 %v405, 0.0
  %v688 = vmax.f32 %v410, 0.0
  %v689 = vmax.f32 %v415, 0.0
  %v690 = vmax.f32 %v420, 0.0
  %v691 = vmax.f32 %v425, 0.0
  %v692 = vmax.f32 %v430, 0.0
  %v693 = vmax.f32 %v435, 0.0
  %v694 = vmax.f32 %v440, 0.0
  %v695 = vmax.f32 %v445, 0.0
  %v696 = vmax.f32 %v450, 0.0
  %v697 = vmax.f32 %v455, 0.0
  %v698 = vmax.f32 %v460, 0.0
  %v699 = vmax.f32 %v465, 0.0
  %v700 = vmax.f32 %v470, 0.0
  %v701 = vmax.f32 %v475, 0.0
  %v702 = vmax.f32 %v480, 0.0
  %v703 = vmax.f32 %v485, 0.0
  %v704 = vmax.f32 %v490, 0.0
  %v705 = vmax.f32 %v495, 0.0
  %v706 = vmax.f32 %v500, 0.0
  %v707 = vmax.f32 %v505, 0.0
  %v708 = vmax.f32 %v510, 0.0
  %v709 = vmax.f32 %v515, 0.0
  %v710 = vmax.f32 %v520, 0.0
  %v711 = vmax.f32 %v525, 0.0
  %v712 = vmax.f32 %v530, 0.0
  %v713 = vmax.f32 %v535, 0.0
  %v714 = vmax.f32 %v540, 0.0
  %v715 = vmax.f32 %v545, 0.0
  %v716 = vmax.f32 %v550, 0.0
  %v717 = vmax.f32 %v555, 0.0
  %v718 = vmax.f32 %v560, 0.0
  %v719 = vmax.f32 %v565, 0.0
  %v720 = vmax.f32 %v570, 0.0
  %v721 = vmax.f32 %v575, 0.0
  %v722 = vmax.f32 %v580, 0.0
  %v723 = vmax.f32 %v585, 0.0
  %v724 = vmax.f32 %v590, 0.0
  %v725 = vmax.f32 %v595, 0.0
  %v726 = vmax.f32 %v600, 0.0
  %v727 = vmax.f32 %v605, 0.0
  %v728 = vmax.f32 %v610, 0.0
  %v729 = vmax.f32 %v615, 0.0
  %v730 = vmax.f32 %v620, 0.0
  %v731 = vmax.f32 %v625, 0.0
  %v732 = vmax.f32 %v630, 0.0
  %v733 = vmax.f32 %v635, 0.0
  %v734 = vmax.f32 %v640, 0.0
  %v735 = vmax.f32 %v645, 0.0
  %v736 = vmax.f32 %v650, 0.0
  %v737 = vmax.f32 %v655, 0.0
  %v738 = vmax.f32 %v660, 0.0
  %v739 = vmax.f32 %v665, 0.0
  %v740 = vmax.f32 %v670, 0.0
  %v741 = vmax.f32 %v675, 0.0
  %v742 = vld [vmem:[%s3] sm:$0x1]
  %v744 = vlaneseq
  %v745 = vshrl.u32 %v744, 7
  %v746 = vsub.s32 0, %v745
  %v747 = vrot.slane %v742, %v746
  %v749 = vmul.f32 %v678, %v747
  %v750 = vmul.f32 %v679, %v747
  %v751 = vmul.f32 %v680, %v747
  %v752 = vmul.f32 %v681, %v747
  %v753 = vmul.f32 %v682, %v747
  %v754 = vmul.f32 %v683, %v747
  %v755 = vmul.f32 %v684, %v747
  %v756 = vmul.f32 %v685, %v747
  %v757 = vmul.f32 %v686, %v747
  %v758 = vmul.f32 %v687, %v747
  %v759 = vmul.f32 %v688, %v747
  %v760 = vmul.f32 %v689, %v747
  %v761 = vmul.f32 %v690, %v747
  %v762 = vmul.f32 %v691, %v747
  %v763 = vmul.f32 %v692, %v747
  %v764 = vmul.f32 %v693, %v747
  %v765 = vmul.f32 %v694, %v747
  %v766 = vmul.f32 %v695, %v747
  %v767 = vmul.f32 %v696, %v747
  %v768 = vmul.f32 %v697, %v747
  %v769 = vmul.f32 %v698, %v747
  %v770 = vmul.f32 %v699, %v747
  %v771 = vmul.f32 %v700, %v747
  %v772 = vmul.f32 %v701, %v747
  %v773 = vmul.f32 %v702, %v747
  %v774 = vmul.f32 %v703, %v747
  %v775 = vmul.f32 %v704, %v747
  %v776 = vmul.f32 %v705, %v747
  %v777 = vmul.f32 %v706, %v747
  %v778 = vmul.f32 %v707, %v747
  %v779 = vmul.f32 %v708, %v747
  %v780 = vmul.f32 %v709, %v747
  %v781 = vmul.f32 %v710, %v747
  %v782 = vmul.f32 %v711, %v747
  %v783 = vmul.f32 %v712, %v747
  %v784 = vmul.f32 %v713, %v747
  %v785 = vmul.f32 %v714, %v747
  %v786 = vmul.f32 %v715, %v747
  %v787 = vmul.f32 %v716, %v747
  %v788 = vmul.f32 %v717, %v747
  %v789 = vmul.f32 %v718, %v747
  %v790 = vmul.f32 %v719, %v747
  %v791 = vmul.f32 %v720, %v747
  %v792 = vmul.f32 %v721, %v747
  %v793 = vmul.f32 %v722, %v747
  %v794 = vmul.f32 %v723, %v747
  %v795 = vmul.f32 %v724, %v747
  %v796 = vmul.f32 %v725, %v747
  %v797 = vmul.f32 %v726, %v747
  %v798 = vmul.f32 %v727, %v747
  %v799 = vmul.f32 %v728, %v747
  %v800 = vmul.f32 %v729, %v747
  %v801 = vmul.f32 %v730, %v747
  %v802 = vmul.f32 %v731, %v747
  %v803 = vmul.f32 %v732, %v747
  %v804 = vmul.f32 %v733, %v747
  %v805 = vmul.f32 %v734, %v747
  %v806 = vmul.f32 %v735, %v747
  %v807 = vmul.f32 %v736, %v747
  %v808 = vmul.f32 %v737, %v747
  %v809 = vmul.f32 %v738, %v747
  %v810 = vmul.f32 %v739, %v747
  %v811 = vmul.f32 %v740, %v747
  %v812 = vmul.f32 %v741, %v747
  %v813 = vld [vmem:[%s4] sm:$0x1]
  %v815 = vlaneseq
  %v816 = vshrl.u32 %v815, 7
  %v817 = vsub.s32 0, %v816
  %v818 = vrot.slane %v813, %v817
  %v820 = vadd.f32 %v749, %v818
  %v821 = vadd.f32 %v750, %v818
  %v822 = vadd.f32 %v751, %v818
  %v823 = vadd.f32 %v752, %v818
  %v824 = vadd.f32 %v753, %v818
  %v825 = vadd.f32 %v754, %v818
  %v826 = vadd.f32 %v755, %v818
  %v827 = vadd.f32 %v756, %v818
  %v828 = vadd.f32 %v757, %v818
  %v829 = vadd.f32 %v758, %v818
  %v830 = vadd.f32 %v759, %v818
  %v831 = vadd.f32 %v760, %v818
  %v832 = vadd.f32 %v761, %v818
  %v833 = vadd.f32 %v762, %v818
  %v834 = vadd.f32 %v763, %v818
  %v835 = vadd.f32 %v764, %v818
  %v836 = vadd.f32 %v765, %v818
  %v837 = vadd.f32 %v766, %v818
  %v838 = vadd.f32 %v767, %v818
  %v839 = vadd.f32 %v768, %v818
  %v840 = vadd.f32 %v769, %v818
  %v841 = vadd.f32 %v770, %v818
  %v842 = vadd.f32 %v771, %v818
  %v843 = vadd.f32 %v772, %v818
  %v844 = vadd.f32 %v773, %v818
  %v845 = vadd.f32 %v774, %v818
  %v846 = vadd.f32 %v775, %v818
  %v847 = vadd.f32 %v776, %v818
  %v848 = vadd.f32 %v777, %v818
  %v849 = vadd.f32 %v778, %v818
  %v850 = vadd.f32 %v779, %v818
  %v851 = vadd.f32 %v780, %v818
  %v852 = vadd.f32 %v781, %v818
  %v853 = vadd.f32 %v782, %v818
  %v854 = vadd.f32 %v783, %v818
  %v855 = vadd.f32 %v784, %v818
  %v856 = vadd.f32 %v785, %v818
  %v857 = vadd.f32 %v786, %v818
  %v858 = vadd.f32 %v787, %v818
  %v859 = vadd.f32 %v788, %v818
  %v860 = vadd.f32 %v789, %v818
  %v861 = vadd.f32 %v790, %v818
  %v862 = vadd.f32 %v791, %v818
  %v863 = vadd.f32 %v792, %v818
  %v864 = vadd.f32 %v793, %v818
  %v865 = vadd.f32 %v794, %v818
  %v866 = vadd.f32 %v795, %v818
  %v867 = vadd.f32 %v796, %v818
  %v868 = vadd.f32 %v797, %v818
  %v869 = vadd.f32 %v798, %v818
  %v870 = vadd.f32 %v799, %v818
  %v871 = vadd.f32 %v800, %v818
  %v872 = vadd.f32 %v801, %v818
  %v873 = vadd.f32 %v802, %v818
  %v874 = vadd.f32 %v803, %v818
  %v875 = vadd.f32 %v804, %v818
  %v876 = vadd.f32 %v805, %v818
  %v877 = vadd.f32 %v806, %v818
  %v878 = vadd.f32 %v807, %v818
  %v879 = vadd.f32 %v808, %v818
  %v880 = vadd.f32 %v809, %v818
  %v881 = vadd.f32 %v810, %v818
  %v882 = vadd.f32 %v811, %v818
  %v883 = vadd.f32 %v812, %v818
  %884 = vst [vmem:[%s5] sm:$0xff] %v820
  %885 = vst [vmem:[%s5 + $0x8] sm:$0xff] %v821
  %886 = vst [vmem:[%s5 + $0x10] sm:$0xff] %v822
  %887 = vst [vmem:[%s5 + $0x18] sm:$0xff] %v823
  %888 = vst [vmem:[%s5 + $0x20] sm:$0xff] %v824
  %889 = vst [vmem:[%s5 + $0x28] sm:$0xff] %v825
  %890 = vst [vmem:[%s5 + $0x30] sm:$0xff] %v826
  %891 = vst [vmem:[%s5 + $0x38] sm:$0xff] %v827
  %892 = vst [vmem:[%s5 + $0x40] sm:$0xff] %v828
  %893 = vst [vmem:[%s5 + $0x48] sm:$0xff] %v829
  %894 = vst [vmem:[%s5 + $0x50] sm:$0xff] %v830
  %895 = vst [vmem:[%s5 + $0x58] sm:$0xff] %v831
  %896 = vst [vmem:[%s5 + $0x60] sm:$0xff] %v832
  %897 = vst [vmem:[%s5 + $0x68] sm:$0xff] %v833
  %898 = vst [vmem:[%s5 + $0x70] sm:$0xff] %v834
  %899 = vst [vmem:[%s5 + $0x78] sm:$0xff] %v835
  %900 = vst [vmem:[%s5 + $0x80] sm:$0xff] %v836
  %901 = vst [vmem:[%s5 + $0x88] sm:$0xff] %v837
  %902 = vst [vmem:[%s5 + $0x90] sm:$0xff] %v838
  %903 = vst [vmem:[%s5 + $0x98] sm:$0xff] %v839
  %904 = vst [vmem:[%s5 + $0xa0] sm:$0xff] %v840
  %905 = vst [vmem:[%s5 + $0xa8] sm:$0xff] %v841
  %906 = vst [vmem:[%s5 + $0xb0] sm:$0xff] %v842
  %907 = vst [vmem:[%s5 + $0xb8] sm:$0xff] %v843
  %908 = vst [vmem:[%s5 + $0xc0] sm:$0xff] %v844
  %909 = vst [vmem:[%s5 + $0xc8] sm:$0xff] %v845
  %910 = vst [vmem:[%s5 + $0xd0] sm:$0xff] %v846
  %911 = vst [vmem:[%s5 + $0xd8] sm:$0xff] %v847
  %912 = vst [vmem:[%s5 + $0xe0] sm:$0xff] %v848
  %913 = vst [vmem:[%s5 + $0xe8] sm:$0xff] %v849
  %914 = vst [vmem:[%s5 + $0xf0] sm:$0xff] %v850
  %915 = vst [vmem:[%s5 + $0xf8] sm:$0xff] %v851
  %916 = vst [vmem:[%s5 + $0x100] sm:$0xff] %v852
  %917 = vst [vmem:[%s5 + $0x108] sm:$0xff] %v853
  %918 = vst [vmem:[%s5 + $0x110] sm:$0xff] %v854
  %919 = vst [vmem:[%s5 + $0x118] sm:$0xff] %v855
  %920 = vst [vmem:[%s5 + $0x120] sm:$0xff] %v856
  %921 = vst [vmem:[%s5 + $0x128] sm:$0xff] %v857
  %922 = vst [vmem:[%s5 + $0x130] sm:$0xff] %v858
  %923 = vst [vmem:[%s5 + $0x138] sm:$0xff] %v859
  %924 = vst [vmem:[%s5 + $0x140] sm:$0xff] %v860
  %925 = vst [vmem:[%s5 + $0x148] sm:$0xff] %v861
  %926 = vst [vmem:[%s5 + $0x150] sm:$0xff] %v862
  %927 = vst [vmem:[%s5 + $0x158] sm:$0xff] %v863
  %928 = vst [vmem:[%s5 + $0x160] sm:$0xff] %v864
  %929 = vst [vmem:[%s5 + $0x168] sm:$0xff] %v865
  %930 = vst [vmem:[%s5 + $0x170] sm:$0xff] %v866
  %931 = vst [vmem:[%s5 + $0x178] sm:$0xff] %v867
  %932 = vst [vmem:[%s5 + $0x180] sm:$0xff] %v868
  %933 = vst [vmem:[%s5 + $0x188] sm:$0xff] %v869
  %934 = vst [vmem:[%s5 + $0x190] sm:$0xff] %v870
  %935 = vst [vmem:[%s5 + $0x198] sm:$0xff] %v871
  %936 = vst [vmem:[%s5 + $0x1a0] sm:$0xff] %v872
  %937 = vst [vmem:[%s5 + $0x1a8] sm:$0xff] %v873
  %938 = vst [vmem:[%s5 + $0x1b0] sm:$0xff] %v874
  %939 = vst [vmem:[%s5 + $0x1b8] sm:$0xff] %v875
  %940 = vst [vmem:[%s5 + $0x1c0] sm:$0xff] %v876
  %941 = vst [vmem:[%s5 + $0x1c8] sm:$0xff] %v877
  %942 = vst [vmem:[%s5 + $0x1d0] sm:$0xff] %v878
  %943 = vst [vmem:[%s5 + $0x1d8] sm:$0xff] %v879
  %944 = vst [vmem:[%s5 + $0x1e0] sm:$0xff] %v880
  %945 = vst [vmem:[%s5 + $0x1e8] sm:$0xff] %v881
  %946 = vst [vmem:[%s5 + $0x1f0] sm:$0xff] %v882
  %947 = vst [vmem:[%s5 + $0x1f8] sm:$0xff] %v883
  // Predicated region
  $region22: #{sparse_conv_block.3} parent=0 // pred_check
    _
  $region23: #{sparse_conv_block.3} parent=0 // pred_check_branch
    %949 = sbr.rel (0) target = $region25
  $region24: #{sparse_conv_block.3} parent=0 // pred_region
    _
  $region25: #{sparse_conv_block.3} parent=0 // pred_fallthru
    _
  // Predicated region
  $region26: #{sparse_conv_block.3} parent=0 // pred_check
    _
  $region27: #{sparse_conv_block.3} parent=0 // pred_check_branch
    %951 = sbr.rel (0) target = $region29
  $region28: #{sparse_conv_block.3} parent=0 // pred_region
    _
  $region29: #{sparse_conv_block.3} parent=0 // pred_fallthru
    _

</llo_original>
